<compile_context>
chip_gen: v7x
topology: tpu7x:2x2x1
jax: 0.10.0
libtpu: 0.0.40
codegen_flags: <defaults>
</compile_context>

<pallas_src>
import functools

import jax
import jax.numpy as jnp
from jax.experimental import pallas as pl
from jax.experimental.pallas import tpu as pltpu


def _round_up(v, m):
    return (v + m - 1) // m * m


# ------------------------------ fused group kernel ---------------------------------

def _residual_group_kernel(x_ref, w_ref, b_ref, o_ref, a_pad, res_ref,
                           *, blk_nums, H, W, C, lead):
    """One grid step = one image: every conv + residual of the group, fused.

    x_ref  : (1, C, H*W)            f32   input image (channel-major, lane-dense)
    w_ref  : (L, 9, C, C)           bf16  packed weights [l, kh*3+kw, c_out, c_in], pinned
    b_ref  : (L, C, 1)              f32   packed biases, pinned
    o_ref  : (1, C, H*W)            f32   output image
    a_pad  : (C, lead + H*W + W+1)  bf16  flat row-padded activation scratch
    res_ref: (C, H*W)               f32   running block-residual stream
    """
    HW = H * W

    # Zero only the padding borders (top pad row + guard, bottom pad row + guard);
    # the interior [lead, lead+HW) is always fully rewritten before it is read.
    a_pad[:, lead - (W + 1):lead] = jnp.zeros((C, W + 1), jnp.bfloat16)
    a_pad[:, lead + HW:lead + HW + W + 1] = jnp.zeros((C, W + 1), jnp.bfloat16)

    # Load the image once; (C, HW) is exactly the flattened NCHW block (no relayout).
    x0 = x_ref[0]                                     # (C, HW) f32
    res_ref[...] = x0                                 # residual stream stays f32
    a_pad[:, lead:lead + HW] = x0.astype(jnp.bfloat16)

    # Lane masks that kill the row-wrap of the +-1 horizontal taps (VPU slot).
    col = jax.lax.broadcasted_iota(jnp.int32, (C, HW), 1) % W
    not_left = col != 0            # valid lanes for kw == 0 taps
    not_right = col != (W - 1)     # valid lanes for kw == 2 taps

    def conv3x3(layer_idx):
        """out(C, HW) = sum_{kh,kw} W[kh,kw](C,C) @ shifted_act(C,HW)  + bias."""
        wl = w_ref[layer_idx]                         # (9, C, C) bf16 (dynamic layer idx)
        acc = None
        for kh in range(3):
            for kw in range(3):
                start = lead + (kh - 1) * W + (kw - 1)
                tap = a_pad[:, start:start + HW]      # (C, HW) bf16, lane-shifted load
                if kw == 0:
                    tap = jnp.where(not_left, tap, 0)
                elif kw == 2:
                    tap = jnp.where(not_right, tap, 0)
                part = jnp.dot(wl[kh * 3 + kw], tap,
                               preferred_element_type=jnp.float32)   # MXU, f32 acc
                acc = part if acc is None else acc + part
        return acc + b_ref[layer_idx]                 # (C, 1) bias, lane-broadcast, f32

    def block_body(i, carry):
        h = jnp.maximum(conv3x3(2 * i), 0.0)          # conv1 + ReLU      (f32)
        a_pad[:, lead:lead + HW] = h.astype(jnp.bfloat16)
        r = conv3x3(2 * i + 1) + res_ref[...]         # conv2 + block residual (f32)
        res_ref[...] = r
        a_pad[:, lead:lead + HW] = r.astype(jnp.bfloat16)
        return carry

    jax.lax.fori_loop(0, blk_nums, block_body, 0)

    # Tail conv + group residual; lane-dense (C, HW) store to o_ref.
    o_ref[0] = conv3x3(2 * blk_nums) + x_ref[0]


# --------------------------------- host wrapper -------------------------------------

def residual_group_forward(x_nchw, params):
    blk_nums = len(params["blocks"])
    n_layers = 2 * blk_nums + 1
    B, C, H, W = x_nchw.shape
    HW = H * W
    lead = _round_up(W + 1, 128)          # interior starts at a 128-aligned lane offset

    # NCHW is already channel-major: flattening (H, W) is a free metadata reshape.
    x = x_nchw.reshape(B, C, HW)

    # Pack all conv parameters once.  HWIO (3,3,Cin,Cout) -> (9, Cout, Cin) so each
    # per-tap GEMM is (Cout,Cin) @ (Cin,HW) with HW on the lane axis.
    ws, bs = [], []
    for p in params["blocks"]:
        ws += [p["w1"], p["w2"]]
        bs += [p["b1"], p["b2"]]
    ws.append(params["w_tail"])
    bs.append(params["b_tail"])
    w_all = jnp.stack([jnp.transpose(w.reshape(9, C, C), (0, 2, 1)) for w in ws]
                      ).astype(jnp.bfloat16)                               # (L, 9, C, C)
    b_all = jnp.stack([b.reshape(C, 1) for b in bs]).astype(jnp.float32)   # (L, C, 1)

    kernel = functools.partial(_residual_group_kernel,
                               blk_nums=blk_nums, H=H, W=W, C=C, lead=lead)

    flops = 2 * B * n_layers * 9 * C * C * HW
    bytes_accessed = 2 * B * C * HW * 4 + w_all.size * 2 + b_all.size * 4

    out = pl.pallas_call(
        kernel,
        grid=(B,),
        in_specs=[
            pl.BlockSpec((1, C, HW), lambda b: (b, 0, 0)),            # per-image block
            pl.BlockSpec((n_layers, 9, C, C), lambda b: (0, 0, 0, 0)),  # pinned weights
            pl.BlockSpec((n_layers, C, 1), lambda b: (0, 0, 0)),        # pinned biases
        ],
        out_specs=pl.BlockSpec((1, C, HW), lambda b: (b, 0, 0)),
        out_shape=jax.ShapeDtypeStruct((B, C, HW), jnp.float32),
        scratch_shapes=[
            pltpu.VMEM((C, lead + HW + W + 1), jnp.bfloat16),  # row-padded activation
            pltpu.VMEM((C, HW), jnp.float32),                  # f32 residual stream
        ],
        compiler_params=pltpu.CompilerParams(
            dimension_semantics=("parallel",),                 # batch axis -> 2 TCs on v7x
            vmem_limit_bytes=64 * 1024 * 1024),
        cost_estimate=pl.CostEstimate(flops=flops, transcendentals=0,
                                      bytes_accessed=bytes_accessed),
    )(x, w_all, b_all)

    return out.reshape(B, C, H, W)


# ------------------------------------ reference --------------------------------------

def residual_group_ref(x_nchw, params):
    """Pure-JAX reference using the same bf16-operand / f32-accumulate recipe."""
    def conv(x, w, b):
        y = jax.lax.conv_general_dilated(
            x.astype(jnp.bfloat16), w.astype(jnp.bfloat16),
            window_strides=(1, 1), padding="SAME",
            dimension_numbers=("NHWC", "HWIO", "NHWC"),
            preferred_element_type=jnp.float32)
        return y + b

    x = jnp.transpose(x_nchw, (0, 2, 3, 1))
    out = x
    for p in params["blocks"]:
        h = jnp.maximum(conv(out, p["w1"], p["b1"]), 0.0)
        out = conv(h, p["w2"], p["b2"]) + out
    out = conv(out, params["w_tail"], params["b_tail"]) + x
    return jnp.transpose(out, (0, 3, 1, 2))


# -------------------------------------- main ------------------------------------------

def make_params(key, num_feats, blk_nums):
    def conv_param(k):
        kw, kb = jax.random.split(k)
        w = 0.05 * jax.random.normal(kw, (3, 3, num_feats, num_feats), jnp.float32)
        b = 0.05 * jax.random.normal(kb, (num_feats,), jnp.float32)
        return w, b

    keys = jax.random.split(key, 2 * blk_nums + 1)
    blocks = []
    for i in range(blk_nums):
        w1, b1 = conv_param(keys[2 * i])
        w2, b2 = conv_param(keys[2 * i + 1])
        blocks.append({"w1": w1, "b1": b1, "w2": w2, "b2": b2})
    w_tail, b_tail = conv_param(keys[-1])
    return {"blocks": blocks, "w_tail": w_tail, "b_tail": b_tail}


if __name__ == "__main__":
    num_feats = 8
    blk_nums = 4
    B, H, W = 2, 16, 16

    key = jax.random.PRNGKey(0)
    k_x, k_p = jax.random.split(key)
    x = jax.random.normal(k_x, (B, num_feats, H, W), jnp.float32)   # NCHW, like PyTorch
    params = make_params(k_p, num_feats, blk_nums)

    fwd = jax.jit(residual_group_forward)
    out = jax.block_until_ready(fwd(x, params))

    ref = jax.block_until_ready(residual_group_ref(x, params))
    assert out.shape == x.shape and out.dtype == x.dtype
    assert jnp.allclose(out, ref, atol=2e-2, rtol=2e-2), "mismatch vs JAX reference"

    print("KERNEL_OK")
</pallas_src>

<mosaic_0001>
module attributes {stable_mosaic.version = 11 : i64} {
  func.func @_residual_group_kernel(%arg0: i32, %arg1: memref<1x8x256xf32, #tpu.memory_space<vmem>>, %arg2: memref<9x9x8x8xbf16, #tpu.memory_space<vmem>>, %arg3: memref<9x8x1xf32, #tpu.memory_space<vmem>>, %arg4: memref<1x8x256xf32, #tpu.memory_space<vmem>>, %arg5: memref<8x401xbf16, #tpu.memory_space<vmem>>, %arg6: memref<8x256xf32, #tpu.memory_space<vmem>>) attributes {dimension_semantics = [#tpu.dimension_semantics<parallel>], iteration_bounds = array<i64: 2>, scalar_prefetch = 0 : i64, scratch_operands = 2 : i64, tpu.core_type = #tpu.core_type<tc>, window_params = [{transform_indices = @transform_0, window_bounds = array<i64: 1, 8, 256>}, {pipeline_mode = #tpu.pipeline_mode<synchronous>, transform_indices = @transform_1, window_bounds = array<i64: 9, 9, 8, 8>}, {pipeline_mode = #tpu.pipeline_mode<synchronous>, transform_indices = @transform_2, window_bounds = array<i64: 9, 8, 1>}, {transform_indices = @transform_3, window_bounds = array<i64: 1, 8, 256>}]} {
    %cst = arith.constant 0.000000e+00 : bf16
    %0 = vector.broadcast %cst : bf16 to vector<8x17xbf16>
    %c0 = arith.constant 0 : index
    %c111 = arith.constant 111 : index
    %1 = vector.load %arg5[%c0, %c111] : memref<8x401xbf16, #tpu.memory_space<vmem>>, vector<8x17xbf16>
    tpu.vector_store %arg5[%c0, %c111], %0 {strides = array<i32>} : memref<8x401xbf16, #tpu.memory_space<vmem>>, vector<8x17xbf16>,
    %cst_0 = arith.constant 0.000000e+00 : bf16
    %2 = vector.broadcast %cst_0 : bf16 to vector<8x17xbf16>
    %c0_1 = arith.constant 0 : index
    %c384 = arith.constant 384 : index
    %3 = vector.load %arg5[%c0_1, %c384] : memref<8x401xbf16, #tpu.memory_space<vmem>>, vector<8x17xbf16>
    tpu.vector_store %arg5[%c0_1, %c384], %2 {strides = array<i32>} : memref<8x401xbf16, #tpu.memory_space<vmem>>, vector<8x17xbf16>,
    %c0_2 = arith.constant 0 : index
    %c0_3 = arith.constant 0 : index
    %c0_4 = arith.constant 0 : index
    %4 = vector.load %arg1[%c0_2, %c0_3, %c0_4] : memref<1x8x256xf32, #tpu.memory_space<vmem>>, vector<1x8x256xf32>
    %5 = vector.shape_cast %4 : vector<1x8x256xf32> to vector<8x256xf32>
    %c0_5 = arith.constant 0 : index
    %c0_6 = arith.constant 0 : index
    %6 = vector.load %arg6[%c0_5, %c0_6] : memref<8x256xf32, #tpu.memory_space<vmem>>, vector<8x256xf32>
    tpu.vector_store %arg6[%c0_5, %c0_6], %5 {strides = array<i32>} : memref<8x256xf32, #tpu.memory_space<vmem>>, vector<8x256xf32>,
    %7 = arith.truncf %5 : vector<8x256xf32> to vector<8x256xbf16>
    %c0_7 = arith.constant 0 : index
    %c128 = arith.constant 128 : index
    %8 = vector.load %arg5[%c0_7, %c128] : memref<8x401xbf16, #tpu.memory_space<vmem>>, vector<8x256xbf16>
    tpu.vector_store %arg5[%c0_7, %c128], %7 {strides = array<i32>} : memref<8x401xbf16, #tpu.memory_space<vmem>>, vector<8x256xbf16>,
    %9 = tpu.iota {dimensions = array<i32: 1>} : vector<8x256xi32>
    %c16_i32 = arith.constant 16 : i32
    %c0_i32 = arith.constant 0 : i32
    %10 = arith.cmpi eq, %c16_i32, %c0_i32 : i32
    %c1_i32 = arith.constant 1 : i32
    %11 = arith.select %10, %c1_i32, %c16_i32 : i32
    %12 = vector.broadcast %11 : i32 to vector<8x256xi32>
    %13 = arith.remsi %9, %12 : vector<8x256xi32>
    %c0_i32_8 = arith.constant 0 : i32
    %14 = vector.broadcast %c0_i32_8 : i32 to vector<8x256xi32>
    %15 = arith.cmpi ne, %13, %14 : vector<8x256xi32>
    %c0_i32_9 = arith.constant 0 : i32
    %16 = vector.broadcast %c0_i32_9 : i32 to vector<8x256xi32>
    %17 = arith.cmpi slt, %13, %16 : vector<8x256xi32>
    %c0_i32_10 = arith.constant 0 : i32
    %18 = arith.cmpi slt, %11, %c0_i32_10 : i32
    %19 = vector.broadcast %18 : i1 to vector<8x256xi1>
    %20 = vector.broadcast %19 : vector<8x256xi1> to vector<8x256xi1>
    %21 = arith.xori %17, %20 : vector<8x256xi1>
    %22 = arith.andi %21, %15 : vector<8x256xi1>
    %23 = vector.broadcast %11 : i32 to vector<8x256xi32>
    %24 = arith.addi %13, %23 : vector<8x256xi32>
    %25 = arith.select %22, %24, %13 : vector<8x256xi1>, vector<8x256xi32>
    %c0_i32_11 = arith.constant 0 : i32
    %26 = vector.broadcast %c0_i32_11 : i32 to vector<8x256xi32>
    %27 = arith.cmpi ne, %25, %26 : vector<8x256xi32>
    %c15_i32 = arith.constant 15 : i32
    %28 = vector.broadcast %c15_i32 : i32 to vector<8x256xi32>
    %29 = arith.cmpi ne, %25, %28 : vector<8x256xi32>
    %c0_i32_12 = arith.constant 0 : i32
    %c4_i32 = arith.constant 4 : i32
    %30 = arith.addi %c0_i32_12, %c4_i32 : i32
    %c1_i32_13 = arith.constant 1 : i32
    scf.for %arg7 = %c0_i32_12 to %30 step %c1_i32_13  : i32 {
      %c2_i32 = arith.constant 2 : i32
      %105 = arith.muli %c2_i32, %arg7 : i32
      %106 = arith.index_cast %105 : i32 to index
      %c0_53 = arith.constant 0 : index
      %c0_54 = arith.constant 0 : index
      %c0_55 = arith.constant 0 : index
      %107 = vector.load %arg2[%106, %c0_53, %c0_54, %c0_55] : memref<9x9x8x8xbf16, #tpu.memory_space<vmem>>, vector<1x9x8x8xbf16>
      %108 = vector.shape_cast %107 : vector<1x9x8x8xbf16> to vector<9x8x8xbf16>
      %c0_56 = arith.constant 0 : index
      %c111_57 = arith.constant 111 : index
      %109 = vector.load %arg5[%c0_56, %c111_57] : memref<8x401xbf16, #tpu.memory_space<vmem>>, vector<8x256xbf16>
      %c0_i32_58 = arith.constant 0 : i32
      %110 = arith.sitofp %c0_i32_58 : i32 to bf16
      %111 = vector.broadcast %110 : bf16 to vector<8x256xbf16>
      %112 = arith.select %27, %109, %111 : vector<8x256xi1>, vector<8x256xbf16>
      %113 = vector.extract_strided_slice %108 {offsets = [0, 0, 0], sizes = [1, 8, 8], strides = [1, 1, 1]} : vector<9x8x8xbf16> to vector<1x8x8xbf16>
      %114 = vector.shape_cast %113 : vector<1x8x8xbf16> to vector<8x8xbf16>
      %cst_59 = arith.constant dense<0.000000e+00> : vector<8x256xf32>
      %115 = tpu.matmul %114, %112, %cst_59 {dimension_numbers = #tpu.dot_dimension_numbers<[1], [0], [0], [1], [0, 0, 1, 1], [], []>} : vector<8x8xbf16>, vector<8x256xbf16>, vector<8x256xf32> -> vector<8x256xf32>
      %c0_60 = arith.constant 0 : index
      %c112_61 = arith.constant 112 : index
      %116 = vector.load %arg5[%c0_60, %c112_61] : memref<8x401xbf16, #tpu.memory_space<vmem>>, vector<8x256xbf16>
      %117 = vector.extract_strided_slice %108 {offsets = [1, 0, 0], sizes = [1, 8, 8], strides = [1, 1, 1]} : vector<9x8x8xbf16> to vector<1x8x8xbf16>
      %118 = vector.shape_cast %117 : vector<1x8x8xbf16> to vector<8x8xbf16>
      %cst_62 = arith.constant dense<0.000000e+00> : vector<8x256xf32>
      %119 = tpu.matmul %118, %116, %cst_62 {dimension_numbers = #tpu.dot_dimension_numbers<[1], [0], [0], [1], [0, 0, 1, 1], [], []>} : vector<8x8xbf16>, vector<8x256xbf16>, vector<8x256xf32> -> vector<8x256xf32>
      %120 = arith.addf %115, %119 : vector<8x256xf32>
      %c0_63 = arith.constant 0 : index
      %c113_64 = arith.constant 113 : index
      %121 = vector.load %arg5[%c0_63, %c113_64] : memref<8x401xbf16, #tpu.memory_space<vmem>>, vector<8x256xbf16>
      %c0_i32_65 = arith.constant 0 : i32
      %122 = arith.sitofp %c0_i32_65 : i32 to bf16
      %123 = vector.broadcast %122 : bf16 to vector<8x256xbf16>
      %124 = arith.select %29, %121, %123 : vector<8x256xi1>, vector<8x256xbf16>
      %125 = vector.extract_strided_slice %108 {offsets = [2, 0, 0], sizes = [1, 8, 8], strides = [1, 1, 1]} : vector<9x8x8xbf16> to vector<1x8x8xbf16>
      %126 = vector.shape_cast %125 : vector<1x8x8xbf16> to vector<8x8xbf16>
      %cst_66 = arith.constant dense<0.000000e+00> : vector<8x256xf32>
      %127 = tpu.matmul %126, %124, %cst_66 {dimension_numbers = #tpu.dot_dimension_numbers<[1], [0], [0], [1], [0, 0, 1, 1], [], []>} : vector<8x8xbf16>, vector<8x256xbf16>, vector<8x256xf32> -> vector<8x256xf32>
      %128 = arith.addf %120, %127 : vector<8x256xf32>
      %c0_67 = arith.constant 0 : index
      %c127_68 = arith.constant 127 : index
      %129 = vector.load %arg5[%c0_67, %c127_68] : memref<8x401xbf16, #tpu.memory_space<vmem>>, vector<8x256xbf16>
      %c0_i32_69 = arith.constant 0 : i32
      %130 = arith.sitofp %c0_i32_69 : i32 to bf16
      %131 = vector.broadcast %130 : bf16 to vector<8x256xbf16>
      %132 = arith.select %27, %129, %131 : vector<8x256xi1>, vector<8x256xbf16>
      %133 = vector.extract_strided_slice %108 {offsets = [3, 0, 0], sizes = [1, 8, 8], strides = [1, 1, 1]} : vector<9x8x8xbf16> to vector<1x8x8xbf16>
      %134 = vector.shape_cast %133 : vector<1x8x8xbf16> to vector<8x8xbf16>
      %cst_70 = arith.constant dense<0.000000e+00> : vector<8x256xf32>
      %135 = tpu.matmul %134, %132, %cst_70 {dimension_numbers = #tpu.dot_dimension_numbers<[1], [0], [0], [1], [0, 0, 1, 1], [], []>} : vector<8x8xbf16>, vector<8x256xbf16>, vector<8x256xf32> -> vector<8x256xf32>
      %136 = arith.addf %128, %135 : vector<8x256xf32>
      %c0_71 = arith.constant 0 : index
      %c128_72 = arith.constant 128 : index
      %137 = vector.load %arg5[%c0_71, %c128_72] : memref<8x401xbf16, #tpu.memory_space<vmem>>, vector<8x256xbf16>
      %138 = vector.extract_strided_slice %108 {offsets = [4, 0, 0], sizes = [1, 8, 8], strides = [1, 1, 1]} : vector<9x8x8xbf16> to vector<1x8x8xbf16>
      %139 = vector.shape_cast %138 : vector<1x8x8xbf16> to vector<8x8xbf16>
      %cst_73 = arith.constant dense<0.000000e+00> : vector<8x256xf32>
      %140 = tpu.matmul %139, %137, %cst_73 {dimension_numbers = #tpu.dot_dimension_numbers<[1], [0], [0], [1], [0, 0, 1, 1], [], []>} : vector<8x8xbf16>, vector<8x256xbf16>, vector<8x256xf32> -> vector<8x256xf32>
      %141 = arith.addf %136, %140 : vector<8x256xf32>
      %c0_74 = arith.constant 0 : index
      %c129_75 = arith.constant 129 : index
      %142 = vector.load %arg5[%c0_74, %c129_75] : memref<8x401xbf16, #tpu.memory_space<vmem>>, vector<8x256xbf16>
      %c0_i32_76 = arith.constant 0 : i32
      %143 = arith.sitofp %c0_i32_76 : i32 to bf16
      %144 = vector.broadcast %143 : bf16 to vector<8x256xbf16>
      %145 = arith.select %29, %142, %144 : vector<8x256xi1>, vector<8x256xbf16>
      %146 = vector.extract_strided_slice %108 {offsets = [5, 0, 0], sizes = [1, 8, 8], strides = [1, 1, 1]} : vector<9x8x8xbf16> to vector<1x8x8xbf16>
      %147 = vector.shape_cast %146 : vector<1x8x8xbf16> to vector<8x8xbf16>
      %cst_77 = arith.constant dense<0.000000e+00> : vector<8x256xf32>
      %148 = tpu.matmul %147, %145, %cst_77 {dimension_numbers = #tpu.dot_dimension_numbers<[1], [0], [0], [1], [0, 0, 1, 1], [], []>} : vector<8x8xbf16>, vector<8x256xbf16>, vector<8x256xf32> -> vector<8x256xf32>
      %149 = arith.addf %141, %148 : vector<8x256xf32>
      %c0_78 = arith.constant 0 : index
      %c143_79 = arith.constant 143 : index
      %150 = vector.load %arg5[%c0_78, %c143_79] : memref<8x401xbf16, #tpu.memory_space<vmem>>, vector<8x256xbf16>
      %c0_i32_80 = arith.constant 0 : i32
      %151 = arith.sitofp %c0_i32_80 : i32 to bf16
      %152 = vector.broadcast %151 : bf16 to vector<8x256xbf16>
      %153 = arith.select %27, %150, %152 : vector<8x256xi1>, vector<8x256xbf16>
      %154 = vector.extract_strided_slice %108 {offsets = [6, 0, 0], sizes = [1, 8, 8], strides = [1, 1, 1]} : vector<9x8x8xbf16> to vector<1x8x8xbf16>
      %155 = vector.shape_cast %154 : vector<1x8x8xbf16> to vector<8x8xbf16>
      %cst_81 = arith.constant dense<0.000000e+00> : vector<8x256xf32>
      %156 = tpu.matmul %155, %153, %cst_81 {dimension_numbers = #tpu.dot_dimension_numbers<[1], [0], [0], [1], [0, 0, 1, 1], [], []>} : vector<8x8xbf16>, vector<8x256xbf16>, vector<8x256xf32> -> vector<8x256xf32>
      %157 = arith.addf %149, %156 : vector<8x256xf32>
      %c0_82 = arith.constant 0 : index
      %c144_83 = arith.constant 144 : index
      %158 = vector.load %arg5[%c0_82, %c144_83] : memref<8x401xbf16, #tpu.memory_space<vmem>>, vector<8x256xbf16>
      %159 = vector.extract_strided_slice %108 {offsets = [7, 0, 0], sizes = [1, 8, 8], strides = [1, 1, 1]} : vector<9x8x8xbf16> to vector<1x8x8xbf16>
      %160 = vector.shape_cast %159 : vector<1x8x8xbf16> to vector<8x8xbf16>
      %cst_84 = arith.constant dense<0.000000e+00> : vector<8x256xf32>
      %161 = tpu.matmul %160, %158, %cst_84 {dimension_numbers = #tpu.dot_dimension_numbers<[1], [0], [0], [1], [0, 0, 1, 1], [], []>} : vector<8x8xbf16>, vector<8x256xbf16>, vector<8x256xf32> -> vector<8x256xf32>
      %162 = arith.addf %157, %161 : vector<8x256xf32>
      %c0_85 = arith.constant 0 : index
      %c145_86 = arith.constant 145 : index
      %163 = vector.load %arg5[%c0_85, %c145_86] : memref<8x401xbf16, #tpu.memory_space<vmem>>, vector<8x256xbf16>
      %c0_i32_87 = arith.constant 0 : i32
      %164 = arith.sitofp %c0_i32_87 : i32 to bf16
      %165 = vector.broadcast %164 : bf16 to vector<8x256xbf16>
      %166 = arith.select %29, %163, %165 : vector<8x256xi1>, vector<8x256xbf16>
      %167 = vector.extract_strided_slice %108 {offsets = [8, 0, 0], sizes = [1, 8, 8], strides = [1, 1, 1]} : vector<9x8x8xbf16> to vector<1x8x8xbf16>
      %168 = vector.shape_cast %167 : vector<1x8x8xbf16> to vector<8x8xbf16>
      %cst_88 = arith.constant dense<0.000000e+00> : vector<8x256xf32>
      %169 = tpu.matmul %168, %166, %cst_88 {dimension_numbers = #tpu.dot_dimension_numbers<[1], [0], [0], [1], [0, 0, 1, 1], [], []>} : vector<8x8xbf16>, vector<8x256xbf16>, vector<8x256xf32> -> vector<8x256xf32>
      %170 = arith.addf %162, %169 : vector<8x256xf32>
      %171 = arith.index_cast %105 : i32 to index
      %c0_89 = arith.constant 0 : index
      %c0_90 = arith.constant 0 : index
      %172 = vector.load %arg3[%171, %c0_89, %c0_90] : memref<9x8x1xf32, #tpu.memory_space<vmem>>, vector<1x8x1xf32>
      %173 = vector.shape_cast %172 : vector<1x8x1xf32> to vector<8x1xf32>
      %174 = vector.broadcast %173 : vector<8x1xf32> to vector<8x256xf32>
      %175 = arith.addf %170, %174 : vector<8x256xf32>
      %cst_91 = arith.constant 0.000000e+00 : f32
      %176 = vector.broadcast %cst_91 : f32 to vector<8x256xf32>
      %177 = arith.maximumf %175, %176 : vector<8x256xf32>
      %178 = arith.truncf %177 : vector<8x256xf32> to vector<8x256xbf16>
      %c0_92 = arith.constant 0 : index
      %c128_93 = arith.constant 128 : index
      %179 = vector.load %arg5[%c0_92, %c128_93] : memref<8x401xbf16, #tpu.memory_space<vmem>>, vector<8x256xbf16>
      tpu.vector_store %arg5[%c0_92, %c128_93], %178 {strides = array<i32>} : memref<8x401xbf16, #tpu.memory_space<vmem>>, vector<8x256xbf16>,
      %c2_i32_94 = arith.constant 2 : i32
      %180 = arith.muli %c2_i32_94, %arg7 : i32
      %c1_i32_95 = arith.constant 1 : i32
      %181 = arith.addi %180, %c1_i32_95 : i32
      %182 = arith.index_cast %181 : i32 to index
      %c0_96 = arith.constant 0 : index
      %c0_97 = arith.constant 0 : index
      %c0_98 = arith.constant 0 : index
      %183 = vector.load %arg2[%182, %c0_96, %c0_97, %c0_98] : memref<9x9x8x8xbf16, #tpu.memory_space<vmem>>, vector<1x9x8x8xbf16>
      %184 = vector.shape_cast %183 : vector<1x9x8x8xbf16> to vector<9x8x8xbf16>
      %c0_99 = arith.constant 0 : index
      %c111_100 = arith.constant 111 : index
      %185 = vector.load %arg5[%c0_99, %c111_100] : memref<8x401xbf16, #tpu.memory_space<vmem>>, vector<8x256xbf16>
      %c0_i32_101 = arith.constant 0 : i32
      %186 = arith.sitofp %c0_i32_101 : i32 to bf16
      %187 = vector.broadcast %186 : bf16 to vector<8x256xbf16>
      %188 = arith.select %27, %185, %187 : vector<8x256xi1>, vector<8x256xbf16>
      %189 = vector.extract_strided_slice %184 {offsets = [0, 0, 0], sizes = [1, 8, 8], strides = [1, 1, 1]} : vector<9x8x8xbf16> to vector<1x8x8xbf16>
      %190 = vector.shape_cast %189 : vector<1x8x8xbf16> to vector<8x8xbf16>
      %cst_102 = arith.constant dense<0.000000e+00> : vector<8x256xf32>
      %191 = tpu.matmul %190, %188, %cst_102 {dimension_numbers = #tpu.dot_dimension_numbers<[1], [0], [0], [1], [0, 0, 1, 1], [], []>} : vector<8x8xbf16>, vector<8x256xbf16>, vector<8x256xf32> -> vector<8x256xf32>
      %c0_103 = arith.constant 0 : index
      %c112_104 = arith.constant 112 : index
      %192 = vector.load %arg5[%c0_103, %c112_104] : memref<8x401xbf16, #tpu.memory_space<vmem>>, vector<8x256xbf16>
      %193 = vector.extract_strided_slice %184 {offsets = [1, 0, 0], sizes = [1, 8, 8], strides = [1, 1, 1]} : vector<9x8x8xbf16> to vector<1x8x8xbf16>
      %194 = vector.shape_cast %193 : vector<1x8x8xbf16> to vector<8x8xbf16>
      %cst_105 = arith.constant dense<0.000000e+00> : vector<8x256xf32>
      %195 = tpu.matmul %194, %192, %cst_105 {dimension_numbers = #tpu.dot_dimension_numbers<[1], [0], [0], [1], [0, 0, 1, 1], [], []>} : vector<8x8xbf16>, vector<8x256xbf16>, vector<8x256xf32> -> vector<8x256xf32>
      %196 = arith.addf %191, %195 : vector<8x256xf32>
      %c0_106 = arith.constant 0 : index
      %c113_107 = arith.constant 113 : index
      %197 = vector.load %arg5[%c0_106, %c113_107] : memref<8x401xbf16, #tpu.memory_space<vmem>>, vector<8x256xbf16>
      %c0_i32_108 = arith.constant 0 : i32
      %198 = arith.sitofp %c0_i32_108 : i32 to bf16
      %199 = vector.broadcast %198 : bf16 to vector<8x256xbf16>
      %200 = arith.select %29, %197, %199 : vector<8x256xi1>, vector<8x256xbf16>
      %201 = vector.extract_strided_slice %184 {offsets = [2, 0, 0], sizes = [1, 8, 8], strides = [1, 1, 1]} : vector<9x8x8xbf16> to vector<1x8x8xbf16>
      %202 = vector.shape_cast %201 : vector<1x8x8xbf16> to vector<8x8xbf16>
      %cst_109 = arith.constant dense<0.000000e+00> : vector<8x256xf32>
      %203 = tpu.matmul %202, %200, %cst_109 {dimension_numbers = #tpu.dot_dimension_numbers<[1], [0], [0], [1], [0, 0, 1, 1], [], []>} : vector<8x8xbf16>, vector<8x256xbf16>, vector<8x256xf32> -> vector<8x256xf32>
      %204 = arith.addf %196, %203 : vector<8x256xf32>
      %c0_110 = arith.constant 0 : index
      %c127_111 = arith.constant 127 : index
      %205 = vector.load %arg5[%c0_110, %c127_111] : memref<8x401xbf16, #tpu.memory_space<vmem>>, vector<8x256xbf16>
      %c0_i32_112 = arith.constant 0 : i32
      %206 = arith.sitofp %c0_i32_112 : i32 to bf16
      %207 = vector.broadcast %206 : bf16 to vector<8x256xbf16>
      %208 = arith.select %27, %205, %207 : vector<8x256xi1>, vector<8x256xbf16>
      %209 = vector.extract_strided_slice %184 {offsets = [3, 0, 0], sizes = [1, 8, 8], strides = [1, 1, 1]} : vector<9x8x8xbf16> to vector<1x8x8xbf16>
      %210 = vector.shape_cast %209 : vector<1x8x8xbf16> to vector<8x8xbf16>
      %cst_113 = arith.constant dense<0.000000e+00> : vector<8x256xf32>
      %211 = tpu.matmul %210, %208, %cst_113 {dimension_numbers = #tpu.dot_dimension_numbers<[1], [0], [0], [1], [0, 0, 1, 1], [], []>} : vector<8x8xbf16>, vector<8x256xbf16>, vector<8x256xf32> -> vector<8x256xf32>
      %212 = arith.addf %204, %211 : vector<8x256xf32>
      %c0_114 = arith.constant 0 : index
      %c128_115 = arith.constant 128 : index
      %213 = vector.load %arg5[%c0_114, %c128_115] : memref<8x401xbf16, #tpu.memory_space<vmem>>, vector<8x256xbf16>
      %214 = vector.extract_strided_slice %184 {offsets = [4, 0, 0], sizes = [1, 8, 8], strides = [1, 1, 1]} : vector<9x8x8xbf16> to vector<1x8x8xbf16>
      %215 = vector.shape_cast %214 : vector<1x8x8xbf16> to vector<8x8xbf16>
      %cst_116 = arith.constant dense<0.000000e+00> : vector<8x256xf32>
      %216 = tpu.matmul %215, %213, %cst_116 {dimension_numbers = #tpu.dot_dimension_numbers<[1], [0], [0], [1], [0, 0, 1, 1], [], []>} : vector<8x8xbf16>, vector<8x256xbf16>, vector<8x256xf32> -> vector<8x256xf32>
      %217 = arith.addf %212, %216 : vector<8x256xf32>
      %c0_117 = arith.constant 0 : index
      %c129_118 = arith.constant 129 : index
      %218 = vector.load %arg5[%c0_117, %c129_118] : memref<8x401xbf16, #tpu.memory_space<vmem>>, vector<8x256xbf16>
      %c0_i32_119 = arith.constant 0 : i32
      %219 = arith.sitofp %c0_i32_119 : i32 to bf16
      %220 = vector.broadcast %219 : bf16 to vector<8x256xbf16>
      %221 = arith.select %29, %218, %220 : vector<8x256xi1>, vector<8x256xbf16>
      %222 = vector.extract_strided_slice %184 {offsets = [5, 0, 0], sizes = [1, 8, 8], strides = [1, 1, 1]} : vector<9x8x8xbf16> to vector<1x8x8xbf16>
      %223 = vector.shape_cast %222 : vector<1x8x8xbf16> to vector<8x8xbf16>
      %cst_120 = arith.constant dense<0.000000e+00> : vector<8x256xf32>
      %224 = tpu.matmul %223, %221, %cst_120 {dimension_numbers = #tpu.dot_dimension_numbers<[1], [0], [0], [1], [0, 0, 1, 1], [], []>} : vector<8x8xbf16>, vector<8x256xbf16>, vector<8x256xf32> -> vector<8x256xf32>
      %225 = arith.addf %217, %224 : vector<8x256xf32>
      %c0_121 = arith.constant 0 : index
      %c143_122 = arith.constant 143 : index
      %226 = vector.load %arg5[%c0_121, %c143_122] : memref<8x401xbf16, #tpu.memory_space<vmem>>, vector<8x256xbf16>
      %c0_i32_123 = arith.constant 0 : i32
      %227 = arith.sitofp %c0_i32_123 : i32 to bf16
      %228 = vector.broadcast %227 : bf16 to vector<8x256xbf16>
      %229 = arith.select %27, %226, %228 : vector<8x256xi1>, vector<8x256xbf16>
      %230 = vector.extract_strided_slice %184 {offsets = [6, 0, 0], sizes = [1, 8, 8], strides = [1, 1, 1]} : vector<9x8x8xbf16> to vector<1x8x8xbf16>
      %231 = vector.shape_cast %230 : vector<1x8x8xbf16> to vector<8x8xbf16>
      %cst_124 = arith.constant dense<0.000000e+00> : vector<8x256xf32>
      %232 = tpu.matmul %231, %229, %cst_124 {dimension_numbers = #tpu.dot_dimension_numbers<[1], [0], [0], [1], [0, 0, 1, 1], [], []>} : vector<8x8xbf16>, vector<8x256xbf16>, vector<8x256xf32> -> vector<8x256xf32>
      %233 = arith.addf %225, %232 : vector<8x256xf32>
      %c0_125 = arith.constant 0 : index
      %c144_126 = arith.constant 144 : index
      %234 = vector.load %arg5[%c0_125, %c144_126] : memref<8x401xbf16, #tpu.memory_space<vmem>>, vector<8x256xbf16>
      %235 = vector.extract_strided_slice %184 {offsets = [7, 0, 0], sizes = [1, 8, 8], strides = [1, 1, 1]} : vector<9x8x8xbf16> to vector<1x8x8xbf16>
      %236 = vector.shape_cast %235 : vector<1x8x8xbf16> to vector<8x8xbf16>
      %cst_127 = arith.constant dense<0.000000e+00> : vector<8x256xf32>
      %237 = tpu.matmul %236, %234, %cst_127 {dimension_numbers = #tpu.dot_dimension_numbers<[1], [0], [0], [1], [0, 0, 1, 1], [], []>} : vector<8x8xbf16>, vector<8x256xbf16>, vector<8x256xf32> -> vector<8x256xf32>
      %238 = arith.addf %233, %237 : vector<8x256xf32>
      %c0_128 = arith.constant 0 : index
      %c145_129 = arith.constant 145 : index
      %239 = vector.load %arg5[%c0_128, %c145_129] : memref<8x401xbf16, #tpu.memory_space<vmem>>, vector<8x256xbf16>
      %c0_i32_130 = arith.constant 0 : i32
      %240 = arith.sitofp %c0_i32_130 : i32 to bf16
      %241 = vector.broadcast %240 : bf16 to vector<8x256xbf16>
      %242 = arith.select %29, %239, %241 : vector<8x256xi1>, vector<8x256xbf16>
      %243 = vector.extract_strided_slice %184 {offsets = [8, 0, 0], sizes = [1, 8, 8], strides = [1, 1, 1]} : vector<9x8x8xbf16> to vector<1x8x8xbf16>
      %244 = vector.shape_cast %243 : vector<1x8x8xbf16> to vector<8x8xbf16>
      %cst_131 = arith.constant dense<0.000000e+00> : vector<8x256xf32>
      %245 = tpu.matmul %244, %242, %cst_131 {dimension_numbers = #tpu.dot_dimension_numbers<[1], [0], [0], [1], [0, 0, 1, 1], [], []>} : vector<8x8xbf16>, vector<8x256xbf16>, vector<8x256xf32> -> vector<8x256xf32>
      %246 = arith.addf %238, %245 : vector<8x256xf32>
      %247 = arith.index_cast %181 : i32 to index
      %c0_132 = arith.constant 0 : index
      %c0_133 = arith.constant 0 : index
      %248 = vector.load %arg3[%247, %c0_132, %c0_133] : memref<9x8x1xf32, #tpu.memory_space<vmem>>, vector<1x8x1xf32>
      %249 = vector.shape_cast %248 : vector<1x8x1xf32> to vector<8x1xf32>
      %250 = vector.broadcast %249 : vector<8x1xf32> to vector<8x256xf32>
      %251 = arith.addf %246, %250 : vector<8x256xf32>
      %c0_134 = arith.constant 0 : index
      %c0_135 = arith.constant 0 : index
      %252 = vector.load %arg6[%c0_134, %c0_135] : memref<8x256xf32, #tpu.memory_space<vmem>>, vector<8x256xf32>
      %253 = arith.addf %251, %252 : vector<8x256xf32>
      %c0_136 = arith.constant 0 : index
      %c0_137 = arith.constant 0 : index
      %254 = vector.load %arg6[%c0_136, %c0_137] : memref<8x256xf32, #tpu.memory_space<vmem>>, vector<8x256xf32>
      tpu.vector_store %arg6[%c0_136, %c0_137], %253 {strides = array<i32>} : memref<8x256xf32, #tpu.memory_space<vmem>>, vector<8x256xf32>,
      %255 = arith.truncf %253 : vector<8x256xf32> to vector<8x256xbf16>
      %c0_138 = arith.constant 0 : index
      %c128_139 = arith.constant 128 : index
      %256 = vector.load %arg5[%c0_138, %c128_139] : memref<8x401xbf16, #tpu.memory_space<vmem>>, vector<8x256xbf16>
      tpu.vector_store %arg5[%c0_138, %c128_139], %255 {strides = array<i32>} : memref<8x401xbf16, #tpu.memory_space<vmem>>, vector<8x256xbf16>,
    }
    %c4_i32_14 = arith.constant 4 : i32
    %c8 = arith.constant 8 : index
    %c0_15 = arith.constant 0 : index
    %c0_16 = arith.constant 0 : index
    %c0_17 = arith.constant 0 : index
    %31 = vector.load %arg2[%c8, %c0_15, %c0_16, %c0_17] : memref<9x9x8x8xbf16, #tpu.memory_space<vmem>>, vector<1x9x8x8xbf16>
    %32 = vector.shape_cast %31 : vector<1x9x8x8xbf16> to vector<9x8x8xbf16>
    %c0_18 = arith.constant 0 : index
    %c111_19 = arith.constant 111 : index
    %33 = vector.load %arg5[%c0_18, %c111_19] : memref<8x401xbf16, #tpu.memory_space<vmem>>, vector<8x256xbf16>
    %c0_i32_20 = arith.constant 0 : i32
    %34 = arith.sitofp %c0_i32_20 : i32 to bf16
    %35 = vector.broadcast %34 : bf16 to vector<8x256xbf16>
    %36 = arith.select %27, %33, %35 : vector<8x256xi1>, vector<8x256xbf16>
    %37 = vector.extract_strided_slice %32 {offsets = [0, 0, 0], sizes = [1, 8, 8], strides = [1, 1, 1]} : vector<9x8x8xbf16> to vector<1x8x8xbf16>
    %38 = vector.shape_cast %37 : vector<1x8x8xbf16> to vector<8x8xbf16>
    %cst_21 = arith.constant dense<0.000000e+00> : vector<8x256xf32>
    %39 = tpu.matmul %38, %36, %cst_21 {dimension_numbers = #tpu.dot_dimension_numbers<[1], [0], [0], [1], [0, 0, 1, 1], [], []>} : vector<8x8xbf16>, vector<8x256xbf16>, vector<8x256xf32> -> vector<8x256xf32>
    %c0_22 = arith.constant 0 : index
    %c112 = arith.constant 112 : index
    %40 = vector.load %arg5[%c0_22, %c112] : memref<8x401xbf16, #tpu.memory_space<vmem>>, vector<8x256xbf16>
    %41 = vector.extract_strided_slice %32 {offsets = [1, 0, 0], sizes = [1, 8, 8], strides = [1, 1, 1]} : vector<9x8x8xbf16> to vector<1x8x8xbf16>
    %42 = vector.shape_cast %41 : vector<1x8x8xbf16> to vector<8x8xbf16>
    %cst_23 = arith.constant dense<0.000000e+00> : vector<8x256xf32>
    %43 = tpu.matmul %42, %40, %cst_23 {dimension_numbers = #tpu.dot_dimension_numbers<[1], [0], [0], [1], [0, 0, 1, 1], [], []>} : vector<8x8xbf16>, vector<8x256xbf16>, vector<8x256xf32> -> vector<8x256xf32>
    %44 = arith.addf %39, %43 : vector<8x256xf32>
    %c0_24 = arith.constant 0 : index
    %c113 = arith.constant 113 : index
    %45 = vector.load %arg5[%c0_24, %c113] : memref<8x401xbf16, #tpu.memory_space<vmem>>, vector<8x256xbf16>
    %c0_i32_25 = arith.constant 0 : i32
    %46 = arith.sitofp %c0_i32_25 : i32 to bf16
    %47 = vector.broadcast %46 : bf16 to vector<8x256xbf16>
    %48 = arith.select %29, %45, %47 : vector<8x256xi1>, vector<8x256xbf16>
    %49 = vector.extract_strided_slice %32 {offsets = [2, 0, 0], sizes = [1, 8, 8], strides = [1, 1, 1]} : vector<9x8x8xbf16> to vector<1x8x8xbf16>
    %50 = vector.shape_cast %49 : vector<1x8x8xbf16> to vector<8x8xbf16>
    %cst_26 = arith.constant dense<0.000000e+00> : vector<8x256xf32>
    %51 = tpu.matmul %50, %48, %cst_26 {dimension_numbers = #tpu.dot_dimension_numbers<[1], [0], [0], [1], [0, 0, 1, 1], [], []>} : vector<8x8xbf16>, vector<8x256xbf16>, vector<8x256xf32> -> vector<8x256xf32>
    %52 = arith.addf %44, %51 : vector<8x256xf32>
    %c0_27 = arith.constant 0 : index
    %c127 = arith.constant 127 : index
    %53 = vector.load %arg5[%c0_27, %c127] : memref<8x401xbf16, #tpu.memory_space<vmem>>, vector<8x256xbf16>
    %c0_i32_28 = arith.constant 0 : i32
    %54 = arith.sitofp %c0_i32_28 : i32 to bf16
    %55 = vector.broadcast %54 : bf16 to vector<8x256xbf16>
    %56 = arith.select %27, %53, %55 : vector<8x256xi1>, vector<8x256xbf16>
    %57 = vector.extract_strided_slice %32 {offsets = [3, 0, 0], sizes = [1, 8, 8], strides = [1, 1, 1]} : vector<9x8x8xbf16> to vector<1x8x8xbf16>
    %58 = vector.shape_cast %57 : vector<1x8x8xbf16> to vector<8x8xbf16>
    %cst_29 = arith.constant dense<0.000000e+00> : vector<8x256xf32>
    %59 = tpu.matmul %58, %56, %cst_29 {dimension_numbers = #tpu.dot_dimension_numbers<[1], [0], [0], [1], [0, 0, 1, 1], [], []>} : vector<8x8xbf16>, vector<8x256xbf16>, vector<8x256xf32> -> vector<8x256xf32>
    %60 = arith.addf %52, %59 : vector<8x256xf32>
    %c0_30 = arith.constant 0 : index
    %c128_31 = arith.constant 128 : index
    %61 = vector.load %arg5[%c0_30, %c128_31] : memref<8x401xbf16, #tpu.memory_space<vmem>>, vector<8x256xbf16>
    %62 = vector.extract_strided_slice %32 {offsets = [4, 0, 0], sizes = [1, 8, 8], strides = [1, 1, 1]} : vector<9x8x8xbf16> to vector<1x8x8xbf16>
    %63 = vector.shape_cast %62 : vector<1x8x8xbf16> to vector<8x8xbf16>
    %cst_32 = arith.constant dense<0.000000e+00> : vector<8x256xf32>
    %64 = tpu.matmul %63, %61, %cst_32 {dimension_numbers = #tpu.dot_dimension_numbers<[1], [0], [0], [1], [0, 0, 1, 1], [], []>} : vector<8x8xbf16>, vector<8x256xbf16>, vector<8x256xf32> -> vector<8x256xf32>
    %65 = arith.addf %60, %64 : vector<8x256xf32>
    %c0_33 = arith.constant 0 : index
    %c129 = arith.constant 129 : index
    %66 = vector.load %arg5[%c0_33, %c129] : memref<8x401xbf16, #tpu.memory_space<vmem>>, vector<8x256xbf16>
    %c0_i32_34 = arith.constant 0 : i32
    %67 = arith.sitofp %c0_i32_34 : i32 to bf16
    %68 = vector.broadcast %67 : bf16 to vector<8x256xbf16>
    %69 = arith.select %29, %66, %68 : vector<8x256xi1>, vector<8x256xbf16>
    %70 = vector.extract_strided_slice %32 {offsets = [5, 0, 0], sizes = [1, 8, 8], strides = [1, 1, 1]} : vector<9x8x8xbf16> to vector<1x8x8xbf16>
    %71 = vector.shape_cast %70 : vector<1x8x8xbf16> to vector<8x8xbf16>
    %cst_35 = arith.constant dense<0.000000e+00> : vector<8x256xf32>
    %72 = tpu.matmul %71, %69, %cst_35 {dimension_numbers = #tpu.dot_dimension_numbers<[1], [0], [0], [1], [0, 0, 1, 1], [], []>} : vector<8x8xbf16>, vector<8x256xbf16>, vector<8x256xf32> -> vector<8x256xf32>
    %73 = arith.addf %65, %72 : vector<8x256xf32>
    %c0_36 = arith.constant 0 : index
    %c143 = arith.constant 143 : index
    %74 = vector.load %arg5[%c0_36, %c143] : memref<8x401xbf16, #tpu.memory_space<vmem>>, vector<8x256xbf16>
    %c0_i32_37 = arith.constant 0 : i32
    %75 = arith.sitofp %c0_i32_37 : i32 to bf16
    %76 = vector.broadcast %75 : bf16 to vector<8x256xbf16>
    %77 = arith.select %27, %74, %76 : vector<8x256xi1>, vector<8x256xbf16>
    %78 = vector.extract_strided_slice %32 {offsets = [6, 0, 0], sizes = [1, 8, 8], strides = [1, 1, 1]} : vector<9x8x8xbf16> to vector<1x8x8xbf16>
    %79 = vector.shape_cast %78 : vector<1x8x8xbf16> to vector<8x8xbf16>
    %cst_38 = arith.constant dense<0.000000e+00> : vector<8x256xf32>
    %80 = tpu.matmul %79, %77, %cst_38 {dimension_numbers = #tpu.dot_dimension_numbers<[1], [0], [0], [1], [0, 0, 1, 1], [], []>} : vector<8x8xbf16>, vector<8x256xbf16>, vector<8x256xf32> -> vector<8x256xf32>
    %81 = arith.addf %73, %80 : vector<8x256xf32>
    %c0_39 = arith.constant 0 : index
    %c144 = arith.constant 144 : index
    %82 = vector.load %arg5[%c0_39, %c144] : memref<8x401xbf16, #tpu.memory_space<vmem>>, vector<8x256xbf16>
    %83 = vector.extract_strided_slice %32 {offsets = [7, 0, 0], sizes = [1, 8, 8], strides = [1, 1, 1]} : vector<9x8x8xbf16> to vector<1x8x8xbf16>
    %84 = vector.shape_cast %83 : vector<1x8x8xbf16> to vector<8x8xbf16>
    %cst_40 = arith.constant dense<0.000000e+00> : vector<8x256xf32>
    %85 = tpu.matmul %84, %82, %cst_40 {dimension_numbers = #tpu.dot_dimension_numbers<[1], [0], [0], [1], [0, 0, 1, 1], [], []>} : vector<8x8xbf16>, vector<8x256xbf16>, vector<8x256xf32> -> vector<8x256xf32>
    %86 = arith.addf %81, %85 : vector<8x256xf32>
    %c0_41 = arith.constant 0 : index
    %c145 = arith.constant 145 : index
    %87 = vector.load %arg5[%c0_41, %c145] : memref<8x401xbf16, #tpu.memory_space<vmem>>, vector<8x256xbf16>
    %c0_i32_42 = arith.constant 0 : i32
    %88 = arith.sitofp %c0_i32_42 : i32 to bf16
    %89 = vector.broadcast %88 : bf16 to vector<8x256xbf16>
    %90 = arith.select %29, %87, %89 : vector<8x256xi1>, vector<8x256xbf16>
    %91 = vector.extract_strided_slice %32 {offsets = [8, 0, 0], sizes = [1, 8, 8], strides = [1, 1, 1]} : vector<9x8x8xbf16> to vector<1x8x8xbf16>
    %92 = vector.shape_cast %91 : vector<1x8x8xbf16> to vector<8x8xbf16>
    %cst_43 = arith.constant dense<0.000000e+00> : vector<8x256xf32>
    %93 = tpu.matmul %92, %90, %cst_43 {dimension_numbers = #tpu.dot_dimension_numbers<[1], [0], [0], [1], [0, 0, 1, 1], [], []>} : vector<8x8xbf16>, vector<8x256xbf16>, vector<8x256xf32> -> vector<8x256xf32>
    %94 = arith.addf %86, %93 : vector<8x256xf32>
    %c8_44 = arith.constant 8 : index
    %c0_45 = arith.constant 0 : index
    %c0_46 = arith.constant 0 : index
    %95 = vector.load %arg3[%c8_44, %c0_45, %c0_46] : memref<9x8x1xf32, #tpu.memory_space<vmem>>, vector<1x8x1xf32>
    %96 = vector.shape_cast %95 : vector<1x8x1xf32> to vector<8x1xf32>
    %97 = vector.broadcast %96 : vector<8x1xf32> to vector<8x256xf32>
    %98 = arith.addf %94, %97 : vector<8x256xf32>
    %c0_47 = arith.constant 0 : index
    %c0_48 = arith.constant 0 : index
    %c0_49 = arith.constant 0 : index
    %99 = vector.load %arg1[%c0_47, %c0_48, %c0_49] : memref<1x8x256xf32, #tpu.memory_space<vmem>>, vector<1x8x256xf32>
    %100 = vector.shape_cast %99 : vector<1x8x256xf32> to vector<8x256xf32>
    %101 = arith.addf %98, %100 : vector<8x256xf32>
    %c0_50 = arith.constant 0 : index
    %c0_51 = arith.constant 0 : index
    %c0_52 = arith.constant 0 : index
    %102 = vector.load %arg4[%c0_50, %c0_51, %c0_52] : memref<1x8x256xf32, #tpu.memory_space<vmem>>, vector<1x8x256xf32>
    %103 = vector.shape_cast %102 : vector<1x8x256xf32> to vector<8x256xf32>
    %104 = vector.shape_cast %101 : vector<8x256xf32> to vector<1x8x256xf32>
    tpu.vector_store %arg4[%c0_50, %c0_51, %c0_52], %104 {strides = array<i32>} : memref<1x8x256xf32, #tpu.memory_space<vmem>>, vector<1x8x256xf32>,
    return
  }
  func.func @transform_0(%arg0: i32) -> (i32, i32, i32) {
    %c0_i32 = arith.constant 0 : i32
    %c0_i32_0 = arith.constant 0 : i32
    %c0_i32_1 = arith.constant 0 : i32
    return %arg0, %c0_i32, %c0_i32_0 : i32, i32, i32
  }
  func.func @transform_1(%arg0: i32) -> (i32, i32, i32, i32) {
    %c0_i32 = arith.constant 0 : i32
    %c0_i32_0 = arith.constant 0 : i32
    %c0_i32_1 = arith.constant 0 : i32
    %c0_i32_2 = arith.constant 0 : i32
    %c0_i32_3 = arith.constant 0 : i32
    return %c0_i32, %c0_i32_0, %c0_i32_1, %c0_i32_2 : i32, i32, i32, i32
  }
  func.func @transform_2(%arg0: i32) -> (i32, i32, i32) {
    %c0_i32 = arith.constant 0 : i32
    %c0_i32_0 = arith.constant 0 : i32
    %c0_i32_1 = arith.constant 0 : i32
    %c0_i32_2 = arith.constant 0 : i32
    return %c0_i32, %c0_i32_0, %c0_i32_1 : i32, i32, i32
  }
  func.func @transform_3(%arg0: i32) -> (i32, i32, i32) {
    %c0_i32 = arith.constant 0 : i32
    %c0_i32_0 = arith.constant 0 : i32
    %c0_i32_1 = arith.constant 0 : i32
    return %arg0, %c0_i32, %c0_i32_0 : i32, i32, i32
  }
}

</mosaic_0001>

<llo_original>
// kernel: residual_group_forward.1
$region0: #{residual_group_forward.1}
  #allocation0 [shape = 'u32[]', space=smem, size = 0x4, offset = 0x4, fixed_abs, tag = 'smem constant byte address 0x4 - core index']
  #allocation1 [shape = 'u32[144,128]{1,0:T(1,128)}', space=vmem, size = 0x12000, scoped, tag = 'internal scratch']
  #allocation2 [shape = 'bf16[8,401]{1,0:T(8,128)(2,1)}', space=vmem, size = 0x2000, scoped, tag = 'scratch operand']
  #allocation3 [shape = 'f32[8,256]{1,0:T(8,128)}', space=vmem, size = 0x2000, scoped, tag = 'scratch operand']
  %s0 = inlined_call_operand.hbm [shape: f32[2,8,256], index: 0, kind: input, shape index: {}]
  %s1 = inlined_call_operand.hbm [shape: bf16[9,9,8,8], index: 1, kind: input, shape index: {}]
  %s2 = inlined_call_operand.hbm [shape: f32[9,8,1], index: 2, kind: input, shape index: {}]
  %s3 = inlined_call_operand.hbm [shape: f32[2,8,256], index: 3, kind: output, shape index: {}]
  %s4 = sld [smem:[#allocation0]]
  $region64: #{residual_group_forward.1} parent=0
    _
  %s6 = ssub.s32 1, %s4
  %s7 = scalar_select 0, %s6, %s4
  $region1: #{residual_group_forward.1} parent=0
    #allocation4 [shape = 'u8[16384]{0}', space=vmem, size = 0x4000, scoped, tag = 'input window, operand 0']
    #allocation5 [shape = 's32[2]{0}', space=sflag, size = 0x8, scoped, tag = 'scoped memory for residual_group_forward.1']
    #allocation6 [shape = 's32[2]{0}', space=sflag, size = 0x8, scoped, tag = 'scoped memory for residual_group_forward.1']
    #allocation7 [shape = 'u8[165888]{0}', space=vmem, size = 0x28800, scoped, tag = 'input window, operand 1, single buffered']
    #allocation8 [shape = 's32[1]{0}', space=sflag, size = 0x4, scoped, tag = 'scoped memory for residual_group_forward.1']
    #allocation9 [shape = 'u8[36864]{0}', space=vmem, size = 0x9000, scoped, tag = 'input window, operand 2, single buffered']
    #allocation10 [shape = 'u8[16384]{0}', space=vmem, size = 0x4000, scoped, tag = 'output window, operand 0']
    %8 = vsyncpa [#allocation5], 0
    %s9 = scalar_lea.sflag [#allocation5], 1
    %10 = vsyncpa %s9, 0
    %11 = vsyncpa [#allocation8], 0
    %12 = vsyncpa [#allocation6], 0
    %s13 = scalar_lea.sflag [#allocation6], 1
    %14 = vsyncpa %s13, 0
    loop: start=0, step=1, limit=4
    $region2: #{residual_group_forward.1} parent=1 // loop_pre_header
      _
    $region3: #{residual_group_forward.1} parent=1 // loop_header
      %s16 = sphi 0, %s20
      %p17 = scmp.ge.s32.totalorder %s16, 4
      %s26 = sphi 0, %s28
      %s29 = sphi 0, %s26
      %s30 = sphi 0, %s29
      %s46 = sphi 0, %s30
      %s50 = sphi 0, %s50
      %s52 = sphi 0, %s50
      %s53 = sphi 0, %s52
      %s67 = sphi 0, %s53
      %s71 = sphi 0, %s71
      %s73 = sphi 0, %s71
      %s74 = sphi 0, %s73
      %s88 = sphi 0, %s74
      %s94 = sphi 0, %s96
      %s97 = sphi 0, %s94
      %s98 = sphi 0, %s97
      %s114 = sphi 0, %s98
    $region4: #{residual_group_forward.1} parent=1 // loop_header_branch
      %19 = sbr.rel (%p17) target = $region8
    $region5: #{residual_group_forward.1} parent=1 // loop_body
      %s21 = ssub.s32 %s16, 1
      %s22 = ssub.s32 %s16, 2
      %s23 = sadd.s32 %s16, 1
      %s24 = ssub.s32 %s16, %s23
      %p25 = scmp.eq.s32.totalorder %s24, 0
      %s27 = sadd.s32 %s26, 1
      %s28 = scalar_select %p25, %s26, %s27
      %p31 = pneg %p25
      %p32 = scmp.eq.s32.totalorder %s16, 1
      %p33 = por %p31, %p32
      %p34 = scmp.ne.s32.totalorder %s26, %s29
      %p35 = scmp.eq.s32.totalorder %s16, 0
      %p36 = por %p34, %p35
      %p37 = scmp.ne.s32.totalorder %s26, %s29
      %p38 = scmp.eq.s32.totalorder %s21, 1
      %p39 = por %p37, %p38
      %p40 = scmp.ne.s32.totalorder %s29, %s30
      %p41 = scmp.eq.s32.totalorder %s21, 0
      %p42 = por %p40, %p41
      %p43 = scmp.ne.s32.totalorder %s29, %s30
      %p44 = scmp.eq.s32.totalorder %s22, 1
      %p45 = por %p43, %p44
      %p47 = scmp.ne.s32.totalorder %s30, %s46
      %p48 = scmp.eq.s32.totalorder %s22, 0
      %p49 = por %p47, %p48
      %s51 = sadd.s32 %s50, 1
      %p54 = scmp.eq.s32.totalorder %s16, 1
      %p55 = scmp.ne.s32.totalorder %s50, %s52
      %p56 = scmp.eq.s32.totalorder %s16, 0
      %p57 = por %p55, %p56
      %p58 = scmp.ne.s32.totalorder %s50, %s52
      %p59 = scmp.eq.s32.totalorder %s21, 1
      %p60 = por %p58, %p59
      %p61 = scmp.ne.s32.totalorder %s52, %s53
      %p62 = scmp.eq.s32.totalorder %s21, 0
      %p63 = por %p61, %p62
      %p64 = scmp.ne.s32.totalorder %s52, %s53
      %p65 = scmp.eq.s32.totalorder %s22, 1
      %p66 = por %p64, %p65
      %p68 = scmp.ne.s32.totalorder %s53, %s67
      %p69 = scmp.eq.s32.totalorder %s22, 0
      %p70 = por %p68, %p69
      %s72 = sadd.s32 %s71, 1
      %p75 = scmp.eq.s32.totalorder %s16, 1
      %p76 = scmp.ne.s32.totalorder %s71, %s73
      %p77 = scmp.eq.s32.totalorder %s16, 0
      %p78 = por %p76, %p77
      %p79 = scmp.ne.s32.totalorder %s71, %s73
      %p80 = scmp.eq.s32.totalorder %s21, 1
      %p81 = por %p79, %p80
      %p82 = scmp.ne.s32.totalorder %s73, %s74
      %p83 = scmp.eq.s32.totalorder %s21, 0
      %p84 = por %p82, %p83
      %p85 = scmp.ne.s32.totalorder %s73, %s74
      %p86 = scmp.eq.s32.totalorder %s22, 1
      %p87 = por %p85, %p86
      %p89 = scmp.ne.s32.totalorder %s74, %s88
      %p90 = scmp.eq.s32.totalorder %s22, 0
      %p91 = por %p89, %p90
      %s92 = ssub.s32 %s16, %s23
      %p93 = scmp.eq.s32.totalorder %s92, 0
      %s95 = sadd.s32 %s94, 1
      %s96 = scalar_select %p93, %s94, %s95
      %p99 = pneg %p93
      %p100 = scmp.eq.s32.totalorder %s16, 1
      %p101 = por %p99, %p100
      %p102 = scmp.ne.s32.totalorder %s94, %s97
      %p103 = scmp.eq.s32.totalorder %s16, 0
      %p104 = por %p102, %p103
      %p105 = scmp.ne.s32.totalorder %s94, %s97
      %p106 = scmp.eq.s32.totalorder %s21, 1
      %p107 = por %p105, %p106
      %p108 = scmp.ne.s32.totalorder %s97, %s98
      %p109 = scmp.eq.s32.totalorder %s21, 0
      %p110 = por %p108, %p109
      %p111 = scmp.ne.s32.totalorder %s97, %s98
      %p112 = scmp.eq.s32.totalorder %s22, 1
      %p113 = por %p111, %p112
      %p115 = scmp.ne.s32.totalorder %s98, %s114
      %p116 = scmp.eq.s32.totalorder %s22, 0
      %p117 = por %p115, %p116
      %p118 = scmp.le.s32.totalorder 1, %s16
      %p119 = scmp.lt.s32.totalorder %s16, 3
      %p120 = pnand %p118, %p119
      %p121 = pneg %p120
      // Predicated region
      $region9: #{residual_group_forward.1} parent=5 // pred_check
        _
      $region10: #{residual_group_forward.1} parent=5 // pred_check_branch
        %123 = sbr.rel (%p120) target = $region12
      $region11: #{residual_group_forward.1} parent=5 // pred_region
        %s124 = ssub.s32 %s16, 1
        // Predicated region
        $region13: #{residual_group_forward.1} parent=11 // pred_check
          %p125 = pneg %p63
        $region14: #{residual_group_forward.1} parent=11 // pred_check_branch
          %127 = sbr.rel (%p125) target = $region16
        $region15: #{residual_group_forward.1} parent=11 // pred_region
          %s129 = ssub.s32 5184, 5184
          %130 = vsyncadd [#allocation8], %s129
          %s131 = sshll.u32 [#allocation7], 4
          %s132 = int_to_ptr.vmem [resolvable:$true] %s131
          %137 = dma.hbm_to_vmem [thread:$0]  %s1, 5184, %s132, [#allocation8], 64, 64, 4
        $region16: #{residual_group_forward.1} parent=11 // pred_fallthru
          _
        // Predicated region
        $region17: #{residual_group_forward.1} parent=11 // pred_check
          %p138 = pneg %p84
        $region18: #{residual_group_forward.1} parent=11 // pred_check_branch
          %140 = sbr.rel (%p138) target = $region20
        $region19: #{residual_group_forward.1} parent=11 // pred_region
          %s142 = ssub.s32 1152, 1152
          %143 = vsyncadd [#allocation8], %s142
          %s144 = sshll.u32 [#allocation9], 4
          %s145 = int_to_ptr.vmem [resolvable:$true] %s144
          %150 = dma.hbm_to_vmem [thread:$0]  %s2, 1152, %s145, [#allocation8], 128, 128, 8
        $region20: #{residual_group_forward.1} parent=11 // pred_fallthru
          _
      $region12: #{residual_group_forward.1} parent=5 // pred_fallthru
        _
      %p151 = scmp.lt.s32.totalorder %s16, 2
      // Predicated region
      $region21: #{residual_group_forward.1} parent=5 // pred_check
        %p152 = pneg %p151
      $region22: #{residual_group_forward.1} parent=5 // pred_check_branch
        %154 = sbr.rel (%p152) target = $region24
      $region23: #{residual_group_forward.1} parent=5 // pred_region
        // Predicated region
        $region25: #{residual_group_forward.1} parent=23 // pred_check
          %p155 = pneg %p36
        $region26: #{residual_group_forward.1} parent=23 // pred_check_branch
          %157 = sbr.rel (%p155) target = $region28
        $region27: #{residual_group_forward.1} parent=23 // pred_region
          %s158 = sand.u32 %s26, 1
          %s159 = scalar_lea.sflag [#allocation5], %s158
          %s160 = sand.u32 %s26, 1
          %s161 = smul.addr %s160, 16
          %s162 = scalar_lea.vmem [#allocation4], %s161
          %s164 = ssub.s32 256, 256
          %165 = vsyncadd %s159, %s164
          %s166 = smul.addr %s16, 2
          %s167 = smul.addr %s166, 128
          %s168 = scalar_lea.hbm %s0, %s167
          %s170 = sshll.u32 %s162, 4
          %s171 = int_to_ptr.vmem [resolvable:$true] %s170
          %173 = dma.hbm_to_vmem [thread:$0]  %s168, 256, %s171, %s159
        $region28: #{residual_group_forward.1} parent=23 // pred_fallthru
          _
      $region24: #{residual_group_forward.1} parent=5 // pred_fallthru
        _
      %p174 = scmp.le.s32.totalorder 1, %s16
      %p175 = scmp.lt.s32.totalorder %s16, 3
      %p176 = pnand %p174, %p175
      %p177 = pneg %p176
      // Predicated region
      $region29: #{residual_group_forward.1} parent=5 // pred_check
        _
      $region30: #{residual_group_forward.1} parent=5 // pred_check_branch
        %179 = sbr.rel (%p176) target = $region32
      $region31: #{residual_group_forward.1} parent=5 // pred_region
        %s180 = ssub.s32 %s16, 1
        %s181 = sand.u32 %s29, 1
        %s182 = scalar_lea.sflag [#allocation5], %s181
        %s183 = sand.u32 %s29, 1
        %s184 = smul.addr %s183, 16
        %s185 = scalar_lea.vmem [#allocation4], %s184
        // Predicated region
        $region33: #{residual_group_forward.1} parent=31 // pred_check
          %p186 = pneg %p42
        $region34: #{residual_group_forward.1} parent=31 // pred_check_branch
          %188 = sbr.rel (%p186) target = $region36
        $region35: #{residual_group_forward.1} parent=31 // pred_region
          %189 = dma.done %s182, 256
        $region36: #{residual_group_forward.1} parent=31 // pred_fallthru
          _
        // Predicated region
        $region37: #{residual_group_forward.1} parent=31 // pred_check
          %p190 = pneg %p63
        $region38: #{residual_group_forward.1} parent=31 // pred_check_branch
          %192 = sbr.rel (%p190) target = $region40
        $region39: #{residual_group_forward.1} parent=31 // pred_region
          %193 = dma.done [#allocation8], 5184
        $region40: #{residual_group_forward.1} parent=31 // pred_fallthru
          _
        // Predicated region
        $region41: #{residual_group_forward.1} parent=31 // pred_check
          %p194 = pneg %p84
        $region42: #{residual_group_forward.1} parent=31 // pred_check_branch
          %196 = sbr.rel (%p194) target = $region44
        $region43: #{residual_group_forward.1} parent=31 // pred_region
          %197 = dma.done [#allocation8], 1152
        $region44: #{residual_group_forward.1} parent=31 // pred_fallthru
          _
        %s198 = sand.u32 %s29, 1
        %s199 = scalar_lea.sflag [#allocation5], %s198
        %s200 = sand.u32 %s29, 1
        %s201 = smul.addr %s200, 16
        %s202 = scalar_lea.vmem [#allocation4], %s201
        %p203 = pneg %p42
        %p204 = pneg %p39
        %p205 = pneg %p63
        %p206 = pneg %p60
        %p207 = pneg %p84
        %p208 = pneg %p81
        %p209 = pneg %p110
        %p210 = pneg %p107
        %s211 = sand.u32 %s97, 1
        %s212 = scalar_lea.sflag [#allocation6], %s211
        %s213 = sand.u32 %s97, 1
        %s214 = smul.addr %s213, 16
        %s215 = scalar_lea.vmem [#allocation10], %s214
        %vm219 = vcmask 1044344
        %220 = vst.msk [vmem:[#allocation2] sm:$0xf] %vm219, 0
        %vm221 = vcmask 134144
        %222 = vst.msk [vmem:[#allocation2 + $0xc] sm:$0xf] %vm221, 0
        %v223 = vld [vmem:[%s185] sm:$0xff]
        %v224 = vld [vmem:[%s185 + $0x8] sm:$0xff]
        %225 = vst [vmem:[#allocation3] sm:$0xff] %v223
        %226 = vst [vmem:[#allocation3 + $0x8] sm:$0xff] %v224
        %v227 = vpack.c.bf16 %v223, %v223
        %v228 = vpack.c.bf16 %v224, %v224
        %v231 = vunpack.c.l.b16 %v227
        %v232 = vunpack.c.l.b16 %v228
        %v233 = vpack.c.b16 %v232, %v231
        %235 = vst [vmem:[#allocation2 + $0x4] sm:$0xff] %v233
        %v236 = vlaneseq
        %v237 = vand.u32 %v236, 127
        %v238 = vadd.s32 %v237, 128
        %vm239 = vcmp.lt.s32.totalorder %v237, 0
        %v240 = vsub.s32 0, %v237
        %v241 = vsel %vm239, %v240, %v237
        %v242 = vshrl.u32 %v241, 4
        %v243 = vand.u32 %v241, 15
        %v244 = vsub.s32 0, %v243
        %v245 = vsel %vm239, %v244, %v243
        %vm246 = vcmp.lt.s32.totalorder %v238, 0
        %v247 = vsub.s32 0, %v238
        %v248 = vsel %vm246, %v247, %v238
        %v249 = vshrl.u32 %v248, 4
        %v250 = vand.u32 %v248, 15
        %v251 = vsub.s32 0, %v250
        %v252 = vsel %vm246, %v251, %v250
        %vm253 = vcmp.ne.s32.totalorder %v245, 0
        %vm254 = vcmp.ne.s32.totalorder %v252, 0
        %vm255 = vcmp.lt.s32.totalorder %v245, 0
        %vm256 = vcmp.lt.s32.totalorder %v252, 0
        %vm257 = vmand %vm255, %vm253
        %vm258 = vmand %vm256, %vm254
        %v259 = vadd.s32 %v245, 16
        %v260 = vadd.s32 %v252, 16
        %v261 = vsel %vm257, %v259, %v245
        %v262 = vsel %vm258, %v260, %v252
        %vm263 = vcmp.ne.s32.totalorder %v261, 0
        %vm264 = vcmp.ne.s32.totalorder %v262, 0
        %vm265 = vcmp.ne.s32.totalorder %v261, 15
        %vm266 = vcmp.ne.s32.totalorder %v262, 15
        loop: start=0, step=1, limit=4
        $region45: #{residual_group_forward.1} parent=31 // loop_pre_header
          _
        $region46: #{residual_group_forward.1} parent=31 // loop_header
          %s268 = sphi 0, %s272
          %p269 = scmp.ge.s32.totalorder %s268, 4
        $region47: #{residual_group_forward.1} parent=31 // loop_header_branch
          %271 = sbr.rel (%p269) target = $region51
        $region48: #{residual_group_forward.1} parent=31 // loop_body
          %s273 = smul.u32 %s268, 2
          %s274 = smul.u32 %s273, 9
          %s275 = smul.addr %s274, 4
          %s276 = scalar_lea.vmem [#allocation7], %s275
          %v277 = vld [vmem:[%s276] sm:$0xf]
          %v278 = vld [vmem:[%s276 + $0x4] sm:$0xf]
          %v279 = vld [vmem:[%s276 + $0x8] sm:$0xf]
          %v280 = vld [vmem:[%s276 + $0xc] sm:$0xf]
          %v281 = vld [vmem:[%s276 + $0x10] sm:$0xf]
          %v282 = vld [vmem:[%s276 + $0x14] sm:$0xf]
          %v283 = vld [vmem:[%s276 + $0x18] sm:$0xf]
          %v284 = vld [vmem:[%s276 + $0x1c] sm:$0xf]
          %v285 = vld [vmem:[%s276 + $0x20] sm:$0xf]
          %v286 = vld [vmem:[#allocation2] sm:$0xff]
          %v287 = vld [vmem:[#allocation2 + $0x8] sm:$0xf]
          %vm288 = vmpackc.low %vm264, %vm263
          %v289 = vsel %vm288, 65537, 0
          %290 = vrot.lane.b32.xlu0 %v289, 111
          %v291 = vpop.permute.xlu0 %290
          %v292 = vrot.slane %v291, 4
          %vm293 = vcmask 908288
          %v294 = vsel %vm293, %v292, %v291
          %vm295 = vcmp.ne.s16.totalorder %v294, 0
          %vm296 = vcmp.ne.s16.totalorder %v292, 0
          %v297 = vsel %vm295, %v286, 0
          %v298 = vsel %vm296, %v287, 0
          %v301 = vunpack.c.l.b16 %v286
          %v302 = vunpack.c.h.b16 %v286
          %v303 = vunpack.c.l.b16 %v287
          %v304 = vpack.c.b16 %v301, %v301
          %v305 = vpack.c.b16 %v302, %v302
          %v306 = vpack.c.b16 %v303, %v303
          %307 = vrot.lane.b32.xlu0 %v304, 16
          %v308 = vpop.permute.xlu0 %307
          %309 = vrot.lane.b32.xlu0 %v305, 16
          %v310 = vpop.permute.xlu0 %309
          %311 = vrot.lane.b32.xlu0 %v306, 16
          %v312 = vpop.permute.xlu0 %311
          %vm313 = vcmask 130048
          %v314 = vsel %vm313, %v308, %v310
          %v315 = vsel %vm313, %v310, %v312
          %vm316 = vcmask 64512
          %v318 = vsel %vm316, %v278, 0
          %vm320 = vcmask 1043456
          %v322 = vsel %vm320, %v314, 0
          %v325 = vsel %vm320, %v315, 0
          %327 = vmatprep.subr.bf16.mxu0 %v325
          %328 = vmatpush1.bf16.msra.mxu0 %v322
          %329 = vmatprep.subr.bf16.mxu0 0
          %330 = vmatpush1.bf16.msra.mxu0 0
          %331 = vmatprep.subr.bf16.mxu0 0
          %332 = vmatpush1.bf16.msra.mxu0 0
          %333 = vmatprep.subr.bf16.mxu0 0
          %334 = vmatpush1.bf16.msra.mxu0 0
          %335 = vmatprep.subr.bf16.mxu0 0
          %336 = vmatpush1.bf16.msra.mxu0 0
          %337 = vmatprep.subr.bf16.mxu0 0
          %338 = vmatpush1.bf16.msra.mxu0 0
          %339 = vmatprep.subr.bf16.mxu0 0
          %340 = vmatpush1.bf16.msra.mxu0 0
          %341 = vmatprep.subr.bf16.mxu0 0
          %342 = vmatpush1.bf16.msra.mxu0 0
          %343 = vmatprep.subr.bf16.mxu0 0
          %344 = vmatpush1.bf16.msra.mxu0 0
          %345 = vmatprep.subr.bf16.mxu0 0
          %346 = vmatpush1.bf16.msra.mxu0 0
          %347 = vmatprep.subr.bf16.mxu0 0
          %348 = vmatpush1.bf16.msra.mxu0 0
          %349 = vmatprep.subr.bf16.mxu0 0
          %350 = vmatpush1.bf16.msra.mxu0 0
          %351 = vmatprep.subr.bf16.mxu0 0
          %352 = vmatpush1.bf16.msra.mxu0 0
          %353 = vmatprep.subr.bf16.mxu0 0
          %354 = vmatpush1.bf16.msra.mxu0 0
          %355 = vmatprep.subr.bf16.mxu0 0
          %356 = vmatpush1.bf16.msra.mxu0 0
          %357 = vmatprep.subr.bf16.mxu0 0
          %358 = vmatpush1.bf16.msra.mxu0 0
          %359 = vmatprep.mubr.bf16.mxu0 0
          %360 = vmatmul.mubr.bf16.gmra.mrb[0].mxu0 %v318
          %v361 = vpop.f32.mrb[0].mxu0
          %v362 = vadd.f32 0.0, %v361
          %v363 = vpop.f32.mrb[0].mxu0
          %v364 = vadd.f32 0.0, %v363
          %v365 = vpop.f32.mrb[0].mxu0
          %v366 = vpop.f32.mrb[0].mxu0
          %367 = vdwg.mxu0
          %v370 = vunpack.c.l.b16 %v297
          %v371 = vunpack.c.h.b16 %v297
          %v372 = vunpack.c.l.b16 %v298
          %v373 = vpack.c.b16 %v370, %v370
          %v374 = vpack.c.b16 %v371, %v371
          %v375 = vpack.c.b16 %v372, %v372
          %376 = vrot.lane.b32.xlu0 %v373, 17
          %v377 = vpop.permute.xlu0 %376
          %378 = vrot.lane.b32.xlu0 %v374, 17
          %v379 = vpop.permute.xlu0 %378
          %380 = vrot.lane.b32.xlu0 %v375, 17
          %v381 = vpop.permute.xlu0 %380
          %vm382 = vcmask 138240
          %v383 = vsel %vm382, %v377, %v379
          %v384 = vsel %vm382, %v379, %v381
          %v386 = vsel %vm316, %v277, 0
          %v389 = vsel %vm320, %v383, 0
          %v392 = vsel %vm320, %v384, 0
          %394 = vmatprep.subr.bf16.mxu0 %v392
          %395 = vmatpush1.bf16.msra.mxu0 %v389
          %396 = vmatprep.subr.bf16.mxu0 0
          %397 = vmatpush1.bf16.msra.mxu0 0
          %398 = vmatprep.subr.bf16.mxu0 0
          %399 = vmatpush1.bf16.msra.mxu0 0
          %400 = vmatprep.subr.bf16.mxu0 0
          %401 = vmatpush1.bf16.msra.mxu0 0
          %402 = vmatprep.subr.bf16.mxu0 0
          %403 = vmatpush1.bf16.msra.mxu0 0
          %404 = vmatprep.subr.bf16.mxu0 0
          %405 = vmatpush1.bf16.msra.mxu0 0
          %406 = vmatprep.subr.bf16.mxu0 0
          %407 = vmatpush1.bf16.msra.mxu0 0
          %408 = vmatprep.subr.bf16.mxu0 0
          %409 = vmatpush1.bf16.msra.mxu0 0
          %410 = vmatprep.subr.bf16.mxu0 0
          %411 = vmatpush1.bf16.msra.mxu0 0
          %412 = vmatprep.subr.bf16.mxu0 0
          %413 = vmatpush1.bf16.msra.mxu0 0
          %414 = vmatprep.subr.bf16.mxu0 0
          %415 = vmatpush1.bf16.msra.mxu0 0
          %416 = vmatprep.subr.bf16.mxu0 0
          %417 = vmatpush1.bf16.msra.mxu0 0
          %418 = vmatprep.subr.bf16.mxu0 0
          %419 = vmatpush1.bf16.msra.mxu0 0
          %420 = vmatprep.subr.bf16.mxu0 0
          %421 = vmatpush1.bf16.msra.mxu0 0
          %422 = vmatprep.subr.bf16.mxu0 0
          %423 = vmatpush1.bf16.msra.mxu0 0
          %424 = vmatprep.subr.bf16.mxu0 0
          %425 = vmatpush1.bf16.msra.mxu0 0
          %426 = vmatprep.mubr.bf16.mxu0 0
          %427 = vmatmul.mubr.bf16.gmra.mrb[0].mxu0 %v386
          %v428 = vpop.f32.mrb[0].mxu0
          %v429 = vadd.f32 %v362, %v428
          %v430 = vpop.f32.mrb[0].mxu0
          %v431 = vadd.f32 %v364, %v430
          %v432 = vpop.f32.mrb[0].mxu0
          %v433 = vpop.f32.mrb[0].mxu0
          %434 = vdwg.mxu0
          %vm435 = vmpackc.low %vm266, %vm265
          %v436 = vsel %vm435, 65537, 0
          %437 = vrot.lane.b32.xlu0 %v436, 113
          %v438 = vpop.permute.xlu0 %437
          %v439 = vrot.slane %v438, 4
          %vm440 = vcmask 924672
          %v441 = vsel %vm440, %v439, %v438
          %vm442 = vcmp.ne.s16.totalorder %v441, 0
          %vm443 = vcmp.ne.s16.totalorder %v439, 0
          %v444 = vsel %vm442, %v286, 0
          %v445 = vsel %vm443, %v287, 0
          %v448 = vunpack.c.l.b16 %v444
          %v449 = vunpack.c.h.b16 %v444
          %v450 = vunpack.c.l.b16 %v445
          %v451 = vpack.c.b16 %v448, %v448
          %v452 = vpack.c.b16 %v449, %v449
          %v453 = vpack.c.b16 %v450, %v450
          %454 = vrot.lane.b32.xlu0 %v451, 15
          %v455 = vpop.permute.xlu0 %454
          %456 = vrot.lane.b32.xlu0 %v452, 15
          %v457 = vpop.permute.xlu0 %456
          %458 = vrot.lane.b32.xlu0 %v453, 15
          %v459 = vpop.permute.xlu0 %458
          %vm460 = vcmask 121856
          %v461 = vsel %vm460, %v455, %v457
          %v462 = vsel %vm460, %v457, %v459
          %v464 = vsel %vm316, %v279, 0
          %v467 = vsel %vm320, %v461, 0
          %v470 = vsel %vm320, %v462, 0
          %472 = vmatprep.subr.bf16.mxu0 %v470
          %473 = vmatpush1.bf16.msra.mxu0 %v467
          %474 = vmatprep.subr.bf16.mxu0 0
          %475 = vmatpush1.bf16.msra.mxu0 0
          %476 = vmatprep.subr.bf16.mxu0 0
          %477 = vmatpush1.bf16.msra.mxu0 0
          %478 = vmatprep.subr.bf16.mxu0 0
          %479 = vmatpush1.bf16.msra.mxu0 0
          %480 = vmatprep.subr.bf16.mxu0 0
          %481 = vmatpush1.bf16.msra.mxu0 0
          %482 = vmatprep.subr.bf16.mxu0 0
          %483 = vmatpush1.bf16.msra.mxu0 0
          %484 = vmatprep.subr.bf16.mxu0 0
          %485 = vmatpush1.bf16.msra.mxu0 0
          %486 = vmatprep.subr.bf16.mxu0 0
          %487 = vmatpush1.bf16.msra.mxu0 0
          %488 = vmatprep.subr.bf16.mxu0 0
          %489 = vmatpush1.bf16.msra.mxu0 0
          %490 = vmatprep.subr.bf16.mxu0 0
          %491 = vmatpush1.bf16.msra.mxu0 0
          %492 = vmatprep.subr.bf16.mxu0 0
          %493 = vmatpush1.bf16.msra.mxu0 0
          %494 = vmatprep.subr.bf16.mxu0 0
          %495 = vmatpush1.bf16.msra.mxu0 0
          %496 = vmatprep.subr.bf16.mxu0 0
          %497 = vmatpush1.bf16.msra.mxu0 0
          %498 = vmatprep.subr.bf16.mxu0 0
          %499 = vmatpush1.bf16.msra.mxu0 0
          %500 = vmatprep.subr.bf16.mxu0 0
          %501 = vmatpush1.bf16.msra.mxu0 0
          %502 = vmatprep.subr.bf16.mxu0 0
          %503 = vmatpush1.bf16.msra.mxu0 0
          %504 = vmatprep.mubr.bf16.mxu0 0
          %505 = vmatmul.mubr.bf16.gmra.mrb[0].mxu0 %v464
          %v506 = vpop.f32.mrb[0].mxu0
          %v507 = vadd.f32 0.0, %v506
          %v508 = vpop.f32.mrb[0].mxu0
          %v509 = vadd.f32 0.0, %v508
          %v510 = vpop.f32.mrb[0].mxu0
          %v511 = vpop.f32.mrb[0].mxu0
          %512 = vdwg.mxu0
          %v513 = vadd.f32 %v429, %v507
          %v514 = vadd.f32 %v431, %v509
          %515 = vrot.lane.b32.xlu0 %v289, 127
          %v516 = vpop.permute.xlu0 %515
          %v517 = vrot.slane %v516, 4
          %vm518 = vcmask 1039360
          %v519 = vsel %vm518, %v517, %v516
          %vm520 = vcmp.ne.s16.totalorder %v519, 0
          %vm521 = vcmp.ne.s16.totalorder %v517, 0
          %v522 = vsel %vm520, %v286, 0
          %v523 = vsel %vm521, %v287, 0
          %v526 = vunpack.c.l.b16 %v522
          %v527 = vunpack.c.h.b16 %v522
          %v528 = vunpack.c.l.b16 %v523
          %v529 = vpack.c.b16 %v526, %v526
          %v530 = vpack.c.b16 %v527, %v527
          %v531 = vpack.c.b16 %v528, %v528
          %532 = vrot.lane.b32.xlu0 %v529, 1
          %v533 = vpop.permute.xlu0 %532
          %534 = vrot.lane.b32.xlu0 %v530, 1
          %v535 = vpop.permute.xlu0 %534
          %536 = vrot.lane.b32.xlu0 %v531, 1
          %v537 = vpop.permute.xlu0 %536
          %vm538 = vcmask 7168
          %v539 = vsel %vm538, %v533, %v535
          %v540 = vsel %vm538, %v535, %v537
          %v542 = vsel %vm316, %v280, 0
          %v545 = vsel %vm320, %v539, 0
          %v548 = vsel %vm320, %v540, 0
          %550 = vmatprep.subr.bf16.mxu0 %v548
          %551 = vmatpush1.bf16.msra.mxu0 %v545
          %552 = vmatprep.subr.bf16.mxu0 0
          %553 = vmatpush1.bf16.msra.mxu0 0
          %554 = vmatprep.subr.bf16.mxu0 0
          %555 = vmatpush1.bf16.msra.mxu0 0
          %556 = vmatprep.subr.bf16.mxu0 0
          %557 = vmatpush1.bf16.msra.mxu0 0
          %558 = vmatprep.subr.bf16.mxu0 0
          %559 = vmatpush1.bf16.msra.mxu0 0
          %560 = vmatprep.subr.bf16.mxu0 0
          %561 = vmatpush1.bf16.msra.mxu0 0
          %562 = vmatprep.subr.bf16.mxu0 0
          %563 = vmatpush1.bf16.msra.mxu0 0
          %564 = vmatprep.subr.bf16.mxu0 0
          %565 = vmatpush1.bf16.msra.mxu0 0
          %566 = vmatprep.subr.bf16.mxu0 0
          %567 = vmatpush1.bf16.msra.mxu0 0
          %568 = vmatprep.subr.bf16.mxu0 0
          %569 = vmatpush1.bf16.msra.mxu0 0
          %570 = vmatprep.subr.bf16.mxu0 0
          %571 = vmatpush1.bf16.msra.mxu0 0
          %572 = vmatprep.subr.bf16.mxu0 0
          %573 = vmatpush1.bf16.msra.mxu0 0
          %574 = vmatprep.subr.bf16.mxu0 0
          %575 = vmatpush1.bf16.msra.mxu0 0
          %576 = vmatprep.subr.bf16.mxu0 0
          %577 = vmatpush1.bf16.msra.mxu0 0
          %578 = vmatprep.subr.bf16.mxu0 0
          %579 = vmatpush1.bf16.msra.mxu0 0
          %580 = vmatprep.subr.bf16.mxu0 0
          %581 = vmatpush1.bf16.msra.mxu0 0
          %582 = vmatprep.mubr.bf16.mxu0 0
          %583 = vmatmul.mubr.bf16.gmra.mrb[0].mxu0 %v542
          %v584 = vpop.f32.mrb[0].mxu0
          %v585 = vadd.f32 0.0, %v584
          %v586 = vpop.f32.mrb[0].mxu0
          %v587 = vadd.f32 0.0, %v586
          %v588 = vpop.f32.mrb[0].mxu0
          %v589 = vpop.f32.mrb[0].mxu0
          %590 = vdwg.mxu0
          %v591 = vadd.f32 %v513, %v585
          %v592 = vadd.f32 %v514, %v587
          %v593 = vld [vmem:[#allocation2 + $0x4] sm:$0xff]
          %v595 = vunpack.c.l.b16 %v593
          %v596 = vunpack.c.h.b16 %v593
          %v597 = vpack.c.b16 %v595, %v595
          %v598 = vpack.c.b16 %v596, %v596
          %v600 = vsel %vm316, %v281, 0
          %v603 = vsel %vm320, %v597, 0
          %v606 = vsel %vm320, %v598, 0
          %608 = vmatprep.subr.bf16.mxu0 %v606
          %609 = vmatpush1.bf16.msra.mxu0 %v603
          %610 = vmatprep.subr.bf16.mxu0 0
          %611 = vmatpush1.bf16.msra.mxu0 0
          %612 = vmatprep.subr.bf16.mxu0 0
          %613 = vmatpush1.bf16.msra.mxu0 0
          %614 = vmatprep.subr.bf16.mxu0 0
          %615 = vmatpush1.bf16.msra.mxu0 0
          %616 = vmatprep.subr.bf16.mxu0 0
          %617 = vmatpush1.bf16.msra.mxu0 0
          %618 = vmatprep.subr.bf16.mxu0 0
          %619 = vmatpush1.bf16.msra.mxu0 0
          %620 = vmatprep.subr.bf16.mxu0 0
          %621 = vmatpush1.bf16.msra.mxu0 0
          %622 = vmatprep.subr.bf16.mxu0 0
          %623 = vmatpush1.bf16.msra.mxu0 0
          %624 = vmatprep.subr.bf16.mxu0 0
          %625 = vmatpush1.bf16.msra.mxu0 0
          %626 = vmatprep.subr.bf16.mxu0 0
          %627 = vmatpush1.bf16.msra.mxu0 0
          %628 = vmatprep.subr.bf16.mxu0 0
          %629 = vmatpush1.bf16.msra.mxu0 0
          %630 = vmatprep.subr.bf16.mxu0 0
          %631 = vmatpush1.bf16.msra.mxu0 0
          %632 = vmatprep.subr.bf16.mxu0 0
          %633 = vmatpush1.bf16.msra.mxu0 0
          %634 = vmatprep.subr.bf16.mxu0 0
          %635 = vmatpush1.bf16.msra.mxu0 0
          %636 = vmatprep.subr.bf16.mxu0 0
          %637 = vmatpush1.bf16.msra.mxu0 0
          %638 = vmatprep.subr.bf16.mxu0 0
          %639 = vmatpush1.bf16.msra.mxu0 0
          %640 = vmatprep.mubr.bf16.mxu0 0
          %641 = vmatmul.mubr.bf16.gmra.mrb[0].mxu0 %v600
          %v642 = vpop.f32.mrb[0].mxu0
          %v643 = vadd.f32 0.0, %v642
          %v644 = vpop.f32.mrb[0].mxu0
          %v645 = vadd.f32 0.0, %v644
          %v646 = vpop.f32.mrb[0].mxu0
          %v647 = vpop.f32.mrb[0].mxu0
          %648 = vdwg.mxu0
          %v649 = vadd.f32 %v591, %v643
          %v650 = vadd.f32 %v592, %v645
          %v651 = vld [vmem:[#allocation2 + $0x4] sm:$0xff]
          %v652 = vld [vmem:[#allocation2 + $0xc] sm:$0xf]
          %653 = vrot.lane.b32.xlu0 %v436, 1
          %v654 = vpop.permute.xlu0 %653
          %v655 = vrot.slane %v654, 4
          %v656 = vsel %vm538, %v655, %v654
          %vm657 = vcmp.ne.s16.totalorder %v656, 0
          %vm658 = vcmp.ne.s16.totalorder %v655, 0
          %v659 = vsel %vm657, %v651, 0
          %v660 = vsel %vm658, %v652, 0
          %v663 = vunpack.c.l.b16 %v659
          %v664 = vunpack.c.h.b16 %v659
          %v665 = vunpack.c.l.b16 %v660
          %v666 = vpack.c.b16 %v663, %v663
          %v667 = vpack.c.b16 %v664, %v664
          %v668 = vpack.c.b16 %v665, %v665
          %669 = vrot.lane.b32.xlu0 %v666, 127
          %v670 = vpop.permute.xlu0 %669
          %671 = vrot.lane.b32.xlu0 %v667, 127
          %v672 = vpop.permute.xlu0 %671
          %673 = vrot.lane.b32.xlu0 %v668, 127
          %v674 = vpop.permute.xlu0 %673
          %v675 = vsel %vm518, %v670, %v672
          %v676 = vsel %vm518, %v672, %v674
          %v678 = vsel %vm316, %v282, 0
          %v681 = vsel %vm320, %v675, 0
          %v684 = vsel %vm320, %v676, 0
          %686 = vmatprep.subr.bf16.mxu0 %v684
          %687 = vmatpush1.bf16.msra.mxu0 %v681
          %688 = vmatprep.subr.bf16.mxu0 0
          %689 = vmatpush1.bf16.msra.mxu0 0
          %690 = vmatprep.subr.bf16.mxu0 0
          %691 = vmatpush1.bf16.msra.mxu0 0
          %692 = vmatprep.subr.bf16.mxu0 0
          %693 = vmatpush1.bf16.msra.mxu0 0
          %694 = vmatprep.subr.bf16.mxu0 0
          %695 = vmatpush1.bf16.msra.mxu0 0
          %696 = vmatprep.subr.bf16.mxu0 0
          %697 = vmatpush1.bf16.msra.mxu0 0
          %698 = vmatprep.subr.bf16.mxu0 0
          %699 = vmatpush1.bf16.msra.mxu0 0
          %700 = vmatprep.subr.bf16.mxu0 0
          %701 = vmatpush1.bf16.msra.mxu0 0
          %702 = vmatprep.subr.bf16.mxu0 0
          %703 = vmatpush1.bf16.msra.mxu0 0
          %704 = vmatprep.subr.bf16.mxu0 0
          %705 = vmatpush1.bf16.msra.mxu0 0
          %706 = vmatprep.subr.bf16.mxu0 0
          %707 = vmatpush1.bf16.msra.mxu0 0
          %708 = vmatprep.subr.bf16.mxu0 0
          %709 = vmatpush1.bf16.msra.mxu0 0
          %710 = vmatprep.subr.bf16.mxu0 0
          %711 = vmatpush1.bf16.msra.mxu0 0
          %712 = vmatprep.subr.bf16.mxu0 0
          %713 = vmatpush1.bf16.msra.mxu0 0
          %714 = vmatprep.subr.bf16.mxu0 0
          %715 = vmatpush1.bf16.msra.mxu0 0
          %716 = vmatprep.subr.bf16.mxu0 0
          %717 = vmatpush1.bf16.msra.mxu0 0
          %718 = vmatprep.mubr.bf16.mxu0 0
          %719 = vmatmul.mubr.bf16.gmra.mrb[0].mxu0 %v678
          %v720 = vpop.f32.mrb[0].mxu0
          %v721 = vadd.f32 0.0, %v720
          %v722 = vpop.f32.mrb[0].mxu0
          %v723 = vadd.f32 0.0, %v722
          %v724 = vpop.f32.mrb[0].mxu0
          %v725 = vpop.f32.mrb[0].mxu0
          %726 = vdwg.mxu0
          %v727 = vadd.f32 %v649, %v721
          %v728 = vadd.f32 %v650, %v723
          %729 = vrot.lane.b32.xlu0 %v289, 15
          %v730 = vpop.permute.xlu0 %729
          %v731 = vrot.slane %v730, 4
          %v732 = vsel %vm460, %v731, %v730
          %vm733 = vcmp.ne.s16.totalorder %v732, 0
          %vm734 = vcmp.ne.s16.totalorder %v731, 0
          %v735 = vsel %vm733, %v651, 0
          %v736 = vsel %vm734, %v652, 0
          %v739 = vunpack.c.l.b16 %v735
          %v740 = vunpack.c.h.b16 %v735
          %v741 = vunpack.c.l.b16 %v736
          %v742 = vpack.c.b16 %v739, %v739
          %v743 = vpack.c.b16 %v740, %v740
          %v744 = vpack.c.b16 %v741, %v741
          %745 = vrot.lane.b32.xlu0 %v742, 113
          %v746 = vpop.permute.xlu0 %745
          %747 = vrot.lane.b32.xlu0 %v743, 113
          %v748 = vpop.permute.xlu0 %747
          %749 = vrot.lane.b32.xlu0 %v744, 113
          %v750 = vpop.permute.xlu0 %749
          %v751 = vsel %vm440, %v746, %v748
          %v752 = vsel %vm440, %v748, %v750
          %v754 = vsel %vm316, %v283, 0
          %v757 = vsel %vm320, %v751, 0
          %v760 = vsel %vm320, %v752, 0
          %762 = vmatprep.subr.bf16.mxu0 %v760
          %763 = vmatpush1.bf16.msra.mxu0 %v757
          %764 = vmatprep.subr.bf16.mxu0 0
          %765 = vmatpush1.bf16.msra.mxu0 0
          %766 = vmatprep.subr.bf16.mxu0 0
          %767 = vmatpush1.bf16.msra.mxu0 0
          %768 = vmatprep.subr.bf16.mxu0 0
          %769 = vmatpush1.bf16.msra.mxu0 0
          %770 = vmatprep.subr.bf16.mxu0 0
          %771 = vmatpush1.bf16.msra.mxu0 0
          %772 = vmatprep.subr.bf16.mxu0 0
          %773 = vmatpush1.bf16.msra.mxu0 0
          %774 = vmatprep.subr.bf16.mxu0 0
          %775 = vmatpush1.bf16.msra.mxu0 0
          %776 = vmatprep.subr.bf16.mxu0 0
          %777 = vmatpush1.bf16.msra.mxu0 0
          %778 = vmatprep.subr.bf16.mxu0 0
          %779 = vmatpush1.bf16.msra.mxu0 0
          %780 = vmatprep.subr.bf16.mxu0 0
          %781 = vmatpush1.bf16.msra.mxu0 0
          %782 = vmatprep.subr.bf16.mxu0 0
          %783 = vmatpush1.bf16.msra.mxu0 0
          %784 = vmatprep.subr.bf16.mxu0 0
          %785 = vmatpush1.bf16.msra.mxu0 0
          %786 = vmatprep.subr.bf16.mxu0 0
          %787 = vmatpush1.bf16.msra.mxu0 0
          %788 = vmatprep.subr.bf16.mxu0 0
          %789 = vmatpush1.bf16.msra.mxu0 0
          %790 = vmatprep.subr.bf16.mxu0 0
          %791 = vmatpush1.bf16.msra.mxu0 0
          %792 = vmatprep.subr.bf16.mxu0 0
          %793 = vmatpush1.bf16.msra.mxu0 0
          %794 = vmatprep.mubr.bf16.mxu0 0
          %795 = vmatmul.mubr.bf16.gmra.mrb[0].mxu0 %v754
          %v796 = vpop.f32.mrb[0].mxu0
          %v797 = vadd.f32 0.0, %v796
          %v798 = vpop.f32.mrb[0].mxu0
          %v799 = vadd.f32 0.0, %v798
          %v800 = vpop.f32.mrb[0].mxu0
          %v801 = vpop.f32.mrb[0].mxu0
          %802 = vdwg.mxu0
          %v803 = vadd.f32 %v727, %v797
          %v804 = vadd.f32 %v728, %v799
          %v807 = vunpack.c.l.b16 %v651
          %v808 = vunpack.c.h.b16 %v651
          %v809 = vunpack.c.l.b16 %v652
          %v810 = vpack.c.b16 %v807, %v807
          %v811 = vpack.c.b16 %v808, %v808
          %v812 = vpack.c.b16 %v809, %v809
          %813 = vrot.lane.b32.xlu0 %v810, 112
          %v814 = vpop.permute.xlu0 %813
          %815 = vrot.lane.b32.xlu0 %v811, 112
          %v816 = vpop.permute.xlu0 %815
          %817 = vrot.lane.b32.xlu0 %v812, 112
          %v818 = vpop.permute.xlu0 %817
          %vm819 = vcmask 916480
          %v820 = vsel %vm819, %v814, %v816
          %v821 = vsel %vm819, %v816, %v818
          %v823 = vsel %vm316, %v284, 0
          %v826 = vsel %vm320, %v820, 0
          %v829 = vsel %vm320, %v821, 0
          %831 = vmatprep.subr.bf16.mxu0 %v829
          %832 = vmatpush1.bf16.msra.mxu0 %v826
          %833 = vmatprep.subr.bf16.mxu0 0
          %834 = vmatpush1.bf16.msra.mxu0 0
          %835 = vmatprep.subr.bf16.mxu0 0
          %836 = vmatpush1.bf16.msra.mxu0 0
          %837 = vmatprep.subr.bf16.mxu0 0
          %838 = vmatpush1.bf16.msra.mxu0 0
          %839 = vmatprep.subr.bf16.mxu0 0
          %840 = vmatpush1.bf16.msra.mxu0 0
          %841 = vmatprep.subr.bf16.mxu0 0
          %842 = vmatpush1.bf16.msra.mxu0 0
          %843 = vmatprep.subr.bf16.mxu0 0
          %844 = vmatpush1.bf16.msra.mxu0 0
          %845 = vmatprep.subr.bf16.mxu0 0
          %846 = vmatpush1.bf16.msra.mxu0 0
          %847 = vmatprep.subr.bf16.mxu0 0
          %848 = vmatpush1.bf16.msra.mxu0 0
          %849 = vmatprep.subr.bf16.mxu0 0
          %850 = vmatpush1.bf16.msra.mxu0 0
          %851 = vmatprep.subr.bf16.mxu0 0
          %852 = vmatpush1.bf16.msra.mxu0 0
          %853 = vmatprep.subr.bf16.mxu0 0
          %854 = vmatpush1.bf16.msra.mxu0 0
          %855 = vmatprep.subr.bf16.mxu0 0
          %856 = vmatpush1.bf16.msra.mxu0 0
          %857 = vmatprep.subr.bf16.mxu0 0
          %858 = vmatpush1.bf16.msra.mxu0 0
          %859 = vmatprep.subr.bf16.mxu0 0
          %860 = vmatpush1.bf16.msra.mxu0 0
          %861 = vmatprep.subr.bf16.mxu0 0
          %862 = vmatpush1.bf16.msra.mxu0 0
          %863 = vmatprep.mubr.bf16.mxu0 0
          %864 = vmatmul.mubr.bf16.gmra.mrb[0].mxu0 %v823
          %v865 = vpop.f32.mrb[0].mxu0
          %v866 = vadd.f32 0.0, %v865
          %v867 = vpop.f32.mrb[0].mxu0
          %v868 = vadd.f32 0.0, %v867
          %v869 = vpop.f32.mrb[0].mxu0
          %v870 = vpop.f32.mrb[0].mxu0
          %871 = vdwg.mxu0
          %v872 = vadd.f32 %v803, %v866
          %v873 = vadd.f32 %v804, %v868
          %874 = vrot.lane.b32.xlu0 %v436, 17
          %v875 = vpop.permute.xlu0 %874
          %v876 = vrot.slane %v875, 4
          %v877 = vsel %vm382, %v876, %v875
          %vm878 = vcmp.ne.s16.totalorder %v877, 0
          %vm879 = vcmp.ne.s16.totalorder %v876, 0
          %v880 = vsel %vm878, %v651, 0
          %v881 = vsel %vm879, %v652, 0
          %v884 = vunpack.c.l.b16 %v880
          %v885 = vunpack.c.h.b16 %v880
          %v886 = vunpack.c.l.b16 %v881
          %v887 = vpack.c.b16 %v884, %v884
          %v888 = vpack.c.b16 %v885, %v885
          %v889 = vpack.c.b16 %v886, %v886
          %890 = vrot.lane.b32.xlu0 %v887, 111
          %v891 = vpop.permute.xlu0 %890
          %892 = vrot.lane.b32.xlu0 %v888, 111
          %v893 = vpop.permute.xlu0 %892
          %894 = vrot.lane.b32.xlu0 %v889, 111
          %v895 = vpop.permute.xlu0 %894
          %v896 = vsel %vm293, %v891, %v893
          %v897 = vsel %vm293, %v893, %v895
          %v899 = vsel %vm316, %v285, 0
          %v902 = vsel %vm320, %v896, 0
          %v905 = vsel %vm320, %v897, 0
          %907 = vmatprep.subr.bf16.mxu0 %v905
          %908 = vmatpush1.bf16.msra.mxu0 %v902
          %909 = vmatprep.subr.bf16.mxu0 0
          %910 = vmatpush1.bf16.msra.mxu0 0
          %911 = vmatprep.subr.bf16.mxu0 0
          %912 = vmatpush1.bf16.msra.mxu0 0
          %913 = vmatprep.subr.bf16.mxu0 0
          %914 = vmatpush1.bf16.msra.mxu0 0
          %915 = vmatprep.subr.bf16.mxu0 0
          %916 = vmatpush1.bf16.msra.mxu0 0
          %917 = vmatprep.subr.bf16.mxu0 0
          %918 = vmatpush1.bf16.msra.mxu0 0
          %919 = vmatprep.subr.bf16.mxu0 0
          %920 = vmatpush1.bf16.msra.mxu0 0
          %921 = vmatprep.subr.bf16.mxu0 0
          %922 = vmatpush1.bf16.msra.mxu0 0
          %923 = vmatprep.subr.bf16.mxu0 0
          %924 = vmatpush1.bf16.msra.mxu0 0
          %925 = vmatprep.subr.bf16.mxu0 0
          %926 = vmatpush1.bf16.msra.mxu0 0
          %927 = vmatprep.subr.bf16.mxu0 0
          %928 = vmatpush1.bf16.msra.mxu0 0
          %929 = vmatprep.subr.bf16.mxu0 0
          %930 = vmatpush1.bf16.msra.mxu0 0
          %931 = vmatprep.subr.bf16.mxu0 0
          %932 = vmatpush1.bf16.msra.mxu0 0
          %933 = vmatprep.subr.bf16.mxu0 0
          %934 = vmatpush1.bf16.msra.mxu0 0
          %935 = vmatprep.subr.bf16.mxu0 0
          %936 = vmatpush1.bf16.msra.mxu0 0
          %937 = vmatprep.subr.bf16.mxu0 0
          %938 = vmatpush1.bf16.msra.mxu0 0
          %939 = vmatprep.mubr.bf16.mxu0 0
          %940 = vmatmul.mubr.bf16.gmra.mrb[0].mxu0 %v899
          %v941 = vpop.f32.mrb[0].mxu0
          %v942 = vadd.f32 0.0, %v941
          %v943 = vpop.f32.mrb[0].mxu0
          %v944 = vadd.f32 0.0, %v943
          %v945 = vpop.f32.mrb[0].mxu0
          %v946 = vpop.f32.mrb[0].mxu0
          %947 = vdwg.mxu0
          %v948 = vadd.f32 %v872, %v942
          %v949 = vadd.f32 %v873, %v944
          %s950 = smul.u32 %s273, 8
          %s951 = scalar_lea.vmem [#allocation9], %s950
          %v952 = vld [vmem:[%s951] sm:$0xff]
          %954 = vset.pattern.permute.xlu0 0
          %955 = vperm.xlu0 %954, %v952
          %v956 = vpop.permute.xlu0 %955
          %v958 = vadd.f32 %v948, %v956
          %v959 = vadd.f32 %v949, %v956
          %v960 = vmax.f32 %v958, 0.0
          %v961 = vmax.f32 %v959, 0.0
          %v962 = vpack.c.bf16 %v960, %v960
          %v963 = vpack.c.bf16 %v961, %v961
          %v966 = vunpack.c.l.b16 %v962
          %v967 = vunpack.c.l.b16 %v963
          %v968 = vpack.c.b16 %v967, %v966
          %970 = vst [vmem:[#allocation2 + $0x4] sm:$0xff] %v968
          %s971 = sadd.s32 %s273, 1
          %s972 = smul.u32 %s971, 9
          %s973 = smul.addr %s972, 4
          %s974 = scalar_lea.vmem [#allocation7], %s973
          %v975 = vld [vmem:[%s974] sm:$0xf]
          %v976 = vld [vmem:[%s974 + $0x4] sm:$0xf]
          %v977 = vld [vmem:[%s974 + $0x8] sm:$0xf]
          %v978 = vld [vmem:[%s974 + $0xc] sm:$0xf]
          %v979 = vld [vmem:[%s974 + $0x10] sm:$0xf]
          %v980 = vld [vmem:[%s974 + $0x14] sm:$0xf]
          %v981 = vld [vmem:[%s974 + $0x18] sm:$0xf]
          %v982 = vld [vmem:[%s974 + $0x1c] sm:$0xf]
          %v983 = vld [vmem:[%s974 + $0x20] sm:$0xf]
          %v984 = vld [vmem:[#allocation2] sm:$0xff]
          %v985 = vld [vmem:[#allocation2 + $0x8] sm:$0xf]
          %v986 = vsel %vm295, %v984, 0
          %v987 = vsel %vm296, %v985, 0
          %v990 = vunpack.c.l.b16 %v984
          %v991 = vunpack.c.h.b16 %v984
          %v992 = vunpack.c.l.b16 %v985
          %v993 = vpack.c.b16 %v990, %v990
          %v994 = vpack.c.b16 %v991, %v991
          %v995 = vpack.c.b16 %v992, %v992
          %996 = vrot.lane.b32.xlu0 %v993, 16
          %v997 = vpop.permute.xlu0 %996
          %998 = vrot.lane.b32.xlu0 %v994, 16
          %v999 = vpop.permute.xlu0 %998
          %1000 = vrot.lane.b32.xlu0 %v995, 16
          %v1001 = vpop.permute.xlu0 %1000
          %v1002 = vsel %vm313, %v997, %v999
          %v1003 = vsel %vm313, %v999, %v1001
          %v1005 = vsel %vm316, %v976, 0
          %v1008 = vsel %vm320, %v1002, 0
          %v1011 = vsel %vm320, %v1003, 0
          %1013 = vmatprep.subr.bf16.mxu0 %v1011
          %1014 = vmatpush1.bf16.msra.mxu0 %v1008
          %1015 = vmatprep.subr.bf16.mxu0 0
          %1016 = vmatpush1.bf16.msra.mxu0 0
          %1017 = vmatprep.subr.bf16.mxu0 0
          %1018 = vmatpush1.bf16.msra.mxu0 0
          %1019 = vmatprep.subr.bf16.mxu0 0
          %1020 = vmatpush1.bf16.msra.mxu0 0
          %1021 = vmatprep.subr.bf16.mxu0 0
          %1022 = vmatpush1.bf16.msra.mxu0 0
          %1023 = vmatprep.subr.bf16.mxu0 0
          %1024 = vmatpush1.bf16.msra.mxu0 0
          %1025 = vmatprep.subr.bf16.mxu0 0
          %1026 = vmatpush1.bf16.msra.mxu0 0
          %1027 = vmatprep.subr.bf16.mxu0 0
          %1028 = vmatpush1.bf16.msra.mxu0 0
          %1029 = vmatprep.subr.bf16.mxu0 0
          %1030 = vmatpush1.bf16.msra.mxu0 0
          %1031 = vmatprep.subr.bf16.mxu0 0
          %1032 = vmatpush1.bf16.msra.mxu0 0
          %1033 = vmatprep.subr.bf16.mxu0 0
          %1034 = vmatpush1.bf16.msra.mxu0 0
          %1035 = vmatprep.subr.bf16.mxu0 0
          %1036 = vmatpush1.bf16.msra.mxu0 0
          %1037 = vmatprep.subr.bf16.mxu0 0
          %1038 = vmatpush1.bf16.msra.mxu0 0
          %1039 = vmatprep.subr.bf16.mxu0 0
          %1040 = vmatpush1.bf16.msra.mxu0 0
          %1041 = vmatprep.subr.bf16.mxu0 0
          %1042 = vmatpush1.bf16.msra.mxu0 0
          %1043 = vmatprep.subr.bf16.mxu0 0
          %1044 = vmatpush1.bf16.msra.mxu0 0
          %1045 = vmatprep.mubr.bf16.mxu0 0
          %1046 = vmatmul.mubr.bf16.gmra.mrb[0].mxu0 %v1005
          %v1047 = vpop.f32.mrb[0].mxu0
          %v1048 = vadd.f32 0.0, %v1047
          %v1049 = vpop.f32.mrb[0].mxu0
          %v1050 = vadd.f32 0.0, %v1049
          %v1051 = vpop.f32.mrb[0].mxu0
          %v1052 = vpop.f32.mrb[0].mxu0
          %1053 = vdwg.mxu0
          %v1056 = vunpack.c.l.b16 %v986
          %v1057 = vunpack.c.h.b16 %v986
          %v1058 = vunpack.c.l.b16 %v987
          %v1059 = vpack.c.b16 %v1056, %v1056
          %v1060 = vpack.c.b16 %v1057, %v1057
          %v1061 = vpack.c.b16 %v1058, %v1058
          %1062 = vrot.lane.b32.xlu0 %v1059, 17
          %v1063 = vpop.permute.xlu0 %1062
          %1064 = vrot.lane.b32.xlu0 %v1060, 17
          %v1065 = vpop.permute.xlu0 %1064
          %1066 = vrot.lane.b32.xlu0 %v1061, 17
          %v1067 = vpop.permute.xlu0 %1066
          %v1068 = vsel %vm382, %v1063, %v1065
          %v1069 = vsel %vm382, %v1065, %v1067
          %v1071 = vsel %vm316, %v975, 0
          %v1074 = vsel %vm320, %v1068, 0
          %v1077 = vsel %vm320, %v1069, 0
          %1079 = vmatprep.subr.bf16.mxu0 %v1077
          %1080 = vmatpush1.bf16.msra.mxu0 %v1074
          %1081 = vmatprep.subr.bf16.mxu0 0
          %1082 = vmatpush1.bf16.msra.mxu0 0
          %1083 = vmatprep.subr.bf16.mxu0 0
          %1084 = vmatpush1.bf16.msra.mxu0 0
          %1085 = vmatprep.subr.bf16.mxu0 0
          %1086 = vmatpush1.bf16.msra.mxu0 0
          %1087 = vmatprep.subr.bf16.mxu0 0
          %1088 = vmatpush1.bf16.msra.mxu0 0
          %1089 = vmatprep.subr.bf16.mxu0 0
          %1090 = vmatpush1.bf16.msra.mxu0 0
          %1091 = vmatprep.subr.bf16.mxu0 0
          %1092 = vmatpush1.bf16.msra.mxu0 0
          %1093 = vmatprep.subr.bf16.mxu0 0
          %1094 = vmatpush1.bf16.msra.mxu0 0
          %1095 = vmatprep.subr.bf16.mxu0 0
          %1096 = vmatpush1.bf16.msra.mxu0 0
          %1097 = vmatprep.subr.bf16.mxu0 0
          %1098 = vmatpush1.bf16.msra.mxu0 0
          %1099 = vmatprep.subr.bf16.mxu0 0
          %1100 = vmatpush1.bf16.msra.mxu0 0
          %1101 = vmatprep.subr.bf16.mxu0 0
          %1102 = vmatpush1.bf16.msra.mxu0 0
          %1103 = vmatprep.subr.bf16.mxu0 0
          %1104 = vmatpush1.bf16.msra.mxu0 0
          %1105 = vmatprep.subr.bf16.mxu0 0
          %1106 = vmatpush1.bf16.msra.mxu0 0
          %1107 = vmatprep.subr.bf16.mxu0 0
          %1108 = vmatpush1.bf16.msra.mxu0 0
          %1109 = vmatprep.subr.bf16.mxu0 0
          %1110 = vmatpush1.bf16.msra.mxu0 0
          %1111 = vmatprep.mubr.bf16.mxu0 0
          %1112 = vmatmul.mubr.bf16.gmra.mrb[0].mxu0 %v1071
          %v1113 = vpop.f32.mrb[0].mxu0
          %v1114 = vadd.f32 %v1048, %v1113
          %v1115 = vpop.f32.mrb[0].mxu0
          %v1116 = vadd.f32 %v1050, %v1115
          %v1117 = vpop.f32.mrb[0].mxu0
          %v1118 = vpop.f32.mrb[0].mxu0
          %1119 = vdwg.mxu0
          %v1120 = vsel %vm442, %v984, 0
          %v1121 = vsel %vm443, %v985, 0
          %v1124 = vunpack.c.l.b16 %v1120
          %v1125 = vunpack.c.h.b16 %v1120
          %v1126 = vunpack.c.l.b16 %v1121
          %v1127 = vpack.c.b16 %v1124, %v1124
          %v1128 = vpack.c.b16 %v1125, %v1125
          %v1129 = vpack.c.b16 %v1126, %v1126
          %1130 = vrot.lane.b32.xlu0 %v1127, 15
          %v1131 = vpop.permute.xlu0 %1130
          %1132 = vrot.lane.b32.xlu0 %v1128, 15
          %v1133 = vpop.permute.xlu0 %1132
          %1134 = vrot.lane.b32.xlu0 %v1129, 15
          %v1135 = vpop.permute.xlu0 %1134
          %v1136 = vsel %vm460, %v1131, %v1133
          %v1137 = vsel %vm460, %v1133, %v1135
          %v1139 = vsel %vm316, %v977, 0
          %v1142 = vsel %vm320, %v1136, 0
          %v1145 = vsel %vm320, %v1137, 0
          %1147 = vmatprep.subr.bf16.mxu0 %v1145
          %1148 = vmatpush1.bf16.msra.mxu0 %v1142
          %1149 = vmatprep.subr.bf16.mxu0 0
          %1150 = vmatpush1.bf16.msra.mxu0 0
          %1151 = vmatprep.subr.bf16.mxu0 0
          %1152 = vmatpush1.bf16.msra.mxu0 0
          %1153 = vmatprep.subr.bf16.mxu0 0
          %1154 = vmatpush1.bf16.msra.mxu0 0
          %1155 = vmatprep.subr.bf16.mxu0 0
          %1156 = vmatpush1.bf16.msra.mxu0 0
          %1157 = vmatprep.subr.bf16.mxu0 0
          %1158 = vmatpush1.bf16.msra.mxu0 0
          %1159 = vmatprep.subr.bf16.mxu0 0
          %1160 = vmatpush1.bf16.msra.mxu0 0
          %1161 = vmatprep.subr.bf16.mxu0 0
          %1162 = vmatpush1.bf16.msra.mxu0 0
          %1163 = vmatprep.subr.bf16.mxu0 0
          %1164 = vmatpush1.bf16.msra.mxu0 0
          %1165 = vmatprep.subr.bf16.mxu0 0
          %1166 = vmatpush1.bf16.msra.mxu0 0
          %1167 = vmatprep.subr.bf16.mxu0 0
          %1168 = vmatpush1.bf16.msra.mxu0 0
          %1169 = vmatprep.subr.bf16.mxu0 0
          %1170 = vmatpush1.bf16.msra.mxu0 0
          %1171 = vmatprep.subr.bf16.mxu0 0
          %1172 = vmatpush1.bf16.msra.mxu0 0
          %1173 = vmatprep.subr.bf16.mxu0 0
          %1174 = vmatpush1.bf16.msra.mxu0 0
          %1175 = vmatprep.subr.bf16.mxu0 0
          %1176 = vmatpush1.bf16.msra.mxu0 0
          %1177 = vmatprep.subr.bf16.mxu0 0
          %1178 = vmatpush1.bf16.msra.mxu0 0
          %1179 = vmatprep.mubr.bf16.mxu0 0
          %1180 = vmatmul.mubr.bf16.gmra.mrb[0].mxu0 %v1139
          %v1181 = vpop.f32.mrb[0].mxu0
          %v1182 = vadd.f32 0.0, %v1181
          %v1183 = vpop.f32.mrb[0].mxu0
          %v1184 = vadd.f32 0.0, %v1183
          %v1185 = vpop.f32.mrb[0].mxu0
          %v1186 = vpop.f32.mrb[0].mxu0
          %1187 = vdwg.mxu0
          %v1188 = vadd.f32 %v1114, %v1182
          %v1189 = vadd.f32 %v1116, %v1184
          %v1190 = vsel %vm520, %v984, 0
          %v1191 = vsel %vm521, %v985, 0
          %v1194 = vunpack.c.l.b16 %v1190
          %v1195 = vunpack.c.h.b16 %v1190
          %v1196 = vunpack.c.l.b16 %v1191
          %v1197 = vpack.c.b16 %v1194, %v1194
          %v1198 = vpack.c.b16 %v1195, %v1195
          %v1199 = vpack.c.b16 %v1196, %v1196
          %1200 = vrot.lane.b32.xlu0 %v1197, 1
          %v1201 = vpop.permute.xlu0 %1200
          %1202 = vrot.lane.b32.xlu0 %v1198, 1
          %v1203 = vpop.permute.xlu0 %1202
          %1204 = vrot.lane.b32.xlu0 %v1199, 1
          %v1205 = vpop.permute.xlu0 %1204
          %v1206 = vsel %vm538, %v1201, %v1203
          %v1207 = vsel %vm538, %v1203, %v1205
          %v1209 = vsel %vm316, %v978, 0
          %v1212 = vsel %vm320, %v1206, 0
          %v1215 = vsel %vm320, %v1207, 0
          %1217 = vmatprep.subr.bf16.mxu0 %v1215
          %1218 = vmatpush1.bf16.msra.mxu0 %v1212
          %1219 = vmatprep.subr.bf16.mxu0 0
          %1220 = vmatpush1.bf16.msra.mxu0 0
          %1221 = vmatprep.subr.bf16.mxu0 0
          %1222 = vmatpush1.bf16.msra.mxu0 0
          %1223 = vmatprep.subr.bf16.mxu0 0
          %1224 = vmatpush1.bf16.msra.mxu0 0
          %1225 = vmatprep.subr.bf16.mxu0 0
          %1226 = vmatpush1.bf16.msra.mxu0 0
          %1227 = vmatprep.subr.bf16.mxu0 0
          %1228 = vmatpush1.bf16.msra.mxu0 0
          %1229 = vmatprep.subr.bf16.mxu0 0
          %1230 = vmatpush1.bf16.msra.mxu0 0
          %1231 = vmatprep.subr.bf16.mxu0 0
          %1232 = vmatpush1.bf16.msra.mxu0 0
          %1233 = vmatprep.subr.bf16.mxu0 0
          %1234 = vmatpush1.bf16.msra.mxu0 0
          %1235 = vmatprep.subr.bf16.mxu0 0
          %1236 = vmatpush1.bf16.msra.mxu0 0
          %1237 = vmatprep.subr.bf16.mxu0 0
          %1238 = vmatpush1.bf16.msra.mxu0 0
          %1239 = vmatprep.subr.bf16.mxu0 0
          %1240 = vmatpush1.bf16.msra.mxu0 0
          %1241 = vmatprep.subr.bf16.mxu0 0
          %1242 = vmatpush1.bf16.msra.mxu0 0
          %1243 = vmatprep.subr.bf16.mxu0 0
          %1244 = vmatpush1.bf16.msra.mxu0 0
          %1245 = vmatprep.subr.bf16.mxu0 0
          %1246 = vmatpush1.bf16.msra.mxu0 0
          %1247 = vmatprep.subr.bf16.mxu0 0
          %1248 = vmatpush1.bf16.msra.mxu0 0
          %1249 = vmatprep.mubr.bf16.mxu0 0
          %1250 = vmatmul.mubr.bf16.gmra.mrb[0].mxu0 %v1209
          %v1251 = vpop.f32.mrb[0].mxu0
          %v1252 = vadd.f32 0.0, %v1251
          %v1253 = vpop.f32.mrb[0].mxu0
          %v1254 = vadd.f32 0.0, %v1253
          %v1255 = vpop.f32.mrb[0].mxu0
          %v1256 = vpop.f32.mrb[0].mxu0
          %1257 = vdwg.mxu0
          %v1258 = vadd.f32 %v1188, %v1252
          %v1259 = vadd.f32 %v1189, %v1254
          %v1260 = vld [vmem:[#allocation2 + $0x4] sm:$0xff]
          %v1262 = vunpack.c.l.b16 %v1260
          %v1263 = vunpack.c.h.b16 %v1260
          %v1264 = vpack.c.b16 %v1262, %v1262
          %v1265 = vpack.c.b16 %v1263, %v1263
          %v1267 = vsel %vm316, %v979, 0
          %v1270 = vsel %vm320, %v1264, 0
          %v1273 = vsel %vm320, %v1265, 0
          %1275 = vmatprep.subr.bf16.mxu0 %v1273
          %1276 = vmatpush1.bf16.msra.mxu0 %v1270
          %1277 = vmatprep.subr.bf16.mxu0 0
          %1278 = vmatpush1.bf16.msra.mxu0 0
          %1279 = vmatprep.subr.bf16.mxu0 0
          %1280 = vmatpush1.bf16.msra.mxu0 0
          %1281 = vmatprep.subr.bf16.mxu0 0
          %1282 = vmatpush1.bf16.msra.mxu0 0
          %1283 = vmatprep.subr.bf16.mxu0 0
          %1284 = vmatpush1.bf16.msra.mxu0 0
          %1285 = vmatprep.subr.bf16.mxu0 0
          %1286 = vmatpush1.bf16.msra.mxu0 0
          %1287 = vmatprep.subr.bf16.mxu0 0
          %1288 = vmatpush1.bf16.msra.mxu0 0
          %1289 = vmatprep.subr.bf16.mxu0 0
          %1290 = vmatpush1.bf16.msra.mxu0 0
          %1291 = vmatprep.subr.bf16.mxu0 0
          %1292 = vmatpush1.bf16.msra.mxu0 0
          %1293 = vmatprep.subr.bf16.mxu0 0
          %1294 = vmatpush1.bf16.msra.mxu0 0
          %1295 = vmatprep.subr.bf16.mxu0 0
          %1296 = vmatpush1.bf16.msra.mxu0 0
          %1297 = vmatprep.subr.bf16.mxu0 0
          %1298 = vmatpush1.bf16.msra.mxu0 0
          %1299 = vmatprep.subr.bf16.mxu0 0
          %1300 = vmatpush1.bf16.msra.mxu0 0
          %1301 = vmatprep.subr.bf16.mxu0 0
          %1302 = vmatpush1.bf16.msra.mxu0 0
          %1303 = vmatprep.subr.bf16.mxu0 0
          %1304 = vmatpush1.bf16.msra.mxu0 0
          %1305 = vmatprep.subr.bf16.mxu0 0
          %1306 = vmatpush1.bf16.msra.mxu0 0
          %1307 = vmatprep.mubr.bf16.mxu0 0
          %1308 = vmatmul.mubr.bf16.gmra.mrb[0].mxu0 %v1267
          %v1309 = vpop.f32.mrb[0].mxu0
          %v1310 = vadd.f32 0.0, %v1309
          %v1311 = vpop.f32.mrb[0].mxu0
          %v1312 = vadd.f32 0.0, %v1311
          %v1313 = vpop.f32.mrb[0].mxu0
          %v1314 = vpop.f32.mrb[0].mxu0
          %1315 = vdwg.mxu0
          %v1316 = vadd.f32 %v1258, %v1310
          %v1317 = vadd.f32 %v1259, %v1312
          %v1318 = vld [vmem:[#allocation2 + $0x4] sm:$0xff]
          %v1319 = vld [vmem:[#allocation2 + $0xc] sm:$0xf]
          %v1320 = vsel %vm657, %v1318, 0
          %v1321 = vsel %vm658, %v1319, 0
          %v1324 = vunpack.c.l.b16 %v1320
          %v1325 = vunpack.c.h.b16 %v1320
          %v1326 = vunpack.c.l.b16 %v1321
          %v1327 = vpack.c.b16 %v1324, %v1324
          %v1328 = vpack.c.b16 %v1325, %v1325
          %v1329 = vpack.c.b16 %v1326, %v1326
          %1330 = vrot.lane.b32.xlu0 %v1327, 127
          %v1331 = vpop.permute.xlu0 %1330
          %1332 = vrot.lane.b32.xlu0 %v1328, 127
          %v1333 = vpop.permute.xlu0 %1332
          %1334 = vrot.lane.b32.xlu0 %v1329, 127
          %v1335 = vpop.permute.xlu0 %1334
          %v1336 = vsel %vm518, %v1331, %v1333
          %v1337 = vsel %vm518, %v1333, %v1335
          %v1339 = vsel %vm316, %v980, 0
          %v1342 = vsel %vm320, %v1336, 0
          %v1345 = vsel %vm320, %v1337, 0
          %1347 = vmatprep.subr.bf16.mxu0 %v1345
          %1348 = vmatpush1.bf16.msra.mxu0 %v1342
          %1349 = vmatprep.subr.bf16.mxu0 0
          %1350 = vmatpush1.bf16.msra.mxu0 0
          %1351 = vmatprep.subr.bf16.mxu0 0
          %1352 = vmatpush1.bf16.msra.mxu0 0
          %1353 = vmatprep.subr.bf16.mxu0 0
          %1354 = vmatpush1.bf16.msra.mxu0 0
          %1355 = vmatprep.subr.bf16.mxu0 0
          %1356 = vmatpush1.bf16.msra.mxu0 0
          %1357 = vmatprep.subr.bf16.mxu0 0
          %1358 = vmatpush1.bf16.msra.mxu0 0
          %1359 = vmatprep.subr.bf16.mxu0 0
          %1360 = vmatpush1.bf16.msra.mxu0 0
          %1361 = vmatprep.subr.bf16.mxu0 0
          %1362 = vmatpush1.bf16.msra.mxu0 0
          %1363 = vmatprep.subr.bf16.mxu0 0
          %1364 = vmatpush1.bf16.msra.mxu0 0
          %1365 = vmatprep.subr.bf16.mxu0 0
          %1366 = vmatpush1.bf16.msra.mxu0 0
          %1367 = vmatprep.subr.bf16.mxu0 0
          %1368 = vmatpush1.bf16.msra.mxu0 0
          %1369 = vmatprep.subr.bf16.mxu0 0
          %1370 = vmatpush1.bf16.msra.mxu0 0
          %1371 = vmatprep.subr.bf16.mxu0 0
          %1372 = vmatpush1.bf16.msra.mxu0 0
          %1373 = vmatprep.subr.bf16.mxu0 0
          %1374 = vmatpush1.bf16.msra.mxu0 0
          %1375 = vmatprep.subr.bf16.mxu0 0
          %1376 = vmatpush1.bf16.msra.mxu0 0
          %1377 = vmatprep.subr.bf16.mxu0 0
          %1378 = vmatpush1.bf16.msra.mxu0 0
          %1379 = vmatprep.mubr.bf16.mxu0 0
          %1380 = vmatmul.mubr.bf16.gmra.mrb[0].mxu0 %v1339
          %v1381 = vpop.f32.mrb[0].mxu0
          %v1382 = vadd.f32 0.0, %v1381
          %v1383 = vpop.f32.mrb[0].mxu0
          %v1384 = vadd.f32 0.0, %v1383
          %v1385 = vpop.f32.mrb[0].mxu0
          %v1386 = vpop.f32.mrb[0].mxu0
          %1387 = vdwg.mxu0
          %v1388 = vadd.f32 %v1316, %v1382
          %v1389 = vadd.f32 %v1317, %v1384
          %v1390 = vsel %vm733, %v1318, 0
          %v1391 = vsel %vm734, %v1319, 0
          %v1394 = vunpack.c.l.b16 %v1390
          %v1395 = vunpack.c.h.b16 %v1390
          %v1396 = vunpack.c.l.b16 %v1391
          %v1397 = vpack.c.b16 %v1394, %v1394
          %v1398 = vpack.c.b16 %v1395, %v1395
          %v1399 = vpack.c.b16 %v1396, %v1396
          %1400 = vrot.lane.b32.xlu0 %v1397, 113
          %v1401 = vpop.permute.xlu0 %1400
          %1402 = vrot.lane.b32.xlu0 %v1398, 113
          %v1403 = vpop.permute.xlu0 %1402
          %1404 = vrot.lane.b32.xlu0 %v1399, 113
          %v1405 = vpop.permute.xlu0 %1404
          %v1406 = vsel %vm440, %v1401, %v1403
          %v1407 = vsel %vm440, %v1403, %v1405
          %v1409 = vsel %vm316, %v981, 0
          %v1412 = vsel %vm320, %v1406, 0
          %v1415 = vsel %vm320, %v1407, 0
          %1417 = vmatprep.subr.bf16.mxu0 %v1415
          %1418 = vmatpush1.bf16.msra.mxu0 %v1412
          %1419 = vmatprep.subr.bf16.mxu0 0
          %1420 = vmatpush1.bf16.msra.mxu0 0
          %1421 = vmatprep.subr.bf16.mxu0 0
          %1422 = vmatpush1.bf16.msra.mxu0 0
          %1423 = vmatprep.subr.bf16.mxu0 0
          %1424 = vmatpush1.bf16.msra.mxu0 0
          %1425 = vmatprep.subr.bf16.mxu0 0
          %1426 = vmatpush1.bf16.msra.mxu0 0
          %1427 = vmatprep.subr.bf16.mxu0 0
          %1428 = vmatpush1.bf16.msra.mxu0 0
          %1429 = vmatprep.subr.bf16.mxu0 0
          %1430 = vmatpush1.bf16.msra.mxu0 0
          %1431 = vmatprep.subr.bf16.mxu0 0
          %1432 = vmatpush1.bf16.msra.mxu0 0
          %1433 = vmatprep.subr.bf16.mxu0 0
          %1434 = vmatpush1.bf16.msra.mxu0 0
          %1435 = vmatprep.subr.bf16.mxu0 0
          %1436 = vmatpush1.bf16.msra.mxu0 0
          %1437 = vmatprep.subr.bf16.mxu0 0
          %1438 = vmatpush1.bf16.msra.mxu0 0
          %1439 = vmatprep.subr.bf16.mxu0 0
          %1440 = vmatpush1.bf16.msra.mxu0 0
          %1441 = vmatprep.subr.bf16.mxu0 0
          %1442 = vmatpush1.bf16.msra.mxu0 0
          %1443 = vmatprep.subr.bf16.mxu0 0
          %1444 = vmatpush1.bf16.msra.mxu0 0
          %1445 = vmatprep.subr.bf16.mxu0 0
          %1446 = vmatpush1.bf16.msra.mxu0 0
          %1447 = vmatprep.subr.bf16.mxu0 0
          %1448 = vmatpush1.bf16.msra.mxu0 0
          %1449 = vmatprep.mubr.bf16.mxu0 0
          %1450 = vmatmul.mubr.bf16.gmra.mrb[0].mxu0 %v1409
          %v1451 = vpop.f32.mrb[0].mxu0
          %v1452 = vadd.f32 0.0, %v1451
          %v1453 = vpop.f32.mrb[0].mxu0
          %v1454 = vadd.f32 0.0, %v1453
          %v1455 = vpop.f32.mrb[0].mxu0
          %v1456 = vpop.f32.mrb[0].mxu0
          %1457 = vdwg.mxu0
          %v1458 = vadd.f32 %v1388, %v1452
          %v1459 = vadd.f32 %v1389, %v1454
          %v1462 = vunpack.c.l.b16 %v1318
          %v1463 = vunpack.c.h.b16 %v1318
          %v1464 = vunpack.c.l.b16 %v1319
          %v1465 = vpack.c.b16 %v1462, %v1462
          %v1466 = vpack.c.b16 %v1463, %v1463
          %v1467 = vpack.c.b16 %v1464, %v1464
          %1468 = vrot.lane.b32.xlu0 %v1465, 112
          %v1469 = vpop.permute.xlu0 %1468
          %1470 = vrot.lane.b32.xlu0 %v1466, 112
          %v1471 = vpop.permute.xlu0 %1470
          %1472 = vrot.lane.b32.xlu0 %v1467, 112
          %v1473 = vpop.permute.xlu0 %1472
          %v1474 = vsel %vm819, %v1469, %v1471
          %v1475 = vsel %vm819, %v1471, %v1473
          %v1477 = vsel %vm316, %v982, 0
          %v1480 = vsel %vm320, %v1474, 0
          %v1483 = vsel %vm320, %v1475, 0
          %1485 = vmatprep.subr.bf16.mxu0 %v1483
          %1486 = vmatpush1.bf16.msra.mxu0 %v1480
          %1487 = vmatprep.subr.bf16.mxu0 0
          %1488 = vmatpush1.bf16.msra.mxu0 0
          %1489 = vmatprep.subr.bf16.mxu0 0
          %1490 = vmatpush1.bf16.msra.mxu0 0
          %1491 = vmatprep.subr.bf16.mxu0 0
          %1492 = vmatpush1.bf16.msra.mxu0 0
          %1493 = vmatprep.subr.bf16.mxu0 0
          %1494 = vmatpush1.bf16.msra.mxu0 0
          %1495 = vmatprep.subr.bf16.mxu0 0
          %1496 = vmatpush1.bf16.msra.mxu0 0
          %1497 = vmatprep.subr.bf16.mxu0 0
          %1498 = vmatpush1.bf16.msra.mxu0 0
          %1499 = vmatprep.subr.bf16.mxu0 0
          %1500 = vmatpush1.bf16.msra.mxu0 0
          %1501 = vmatprep.subr.bf16.mxu0 0
          %1502 = vmatpush1.bf16.msra.mxu0 0
          %1503 = vmatprep.subr.bf16.mxu0 0
          %1504 = vmatpush1.bf16.msra.mxu0 0
          %1505 = vmatprep.subr.bf16.mxu0 0
          %1506 = vmatpush1.bf16.msra.mxu0 0
          %1507 = vmatprep.subr.bf16.mxu0 0
          %1508 = vmatpush1.bf16.msra.mxu0 0
          %1509 = vmatprep.subr.bf16.mxu0 0
          %1510 = vmatpush1.bf16.msra.mxu0 0
          %1511 = vmatprep.subr.bf16.mxu0 0
          %1512 = vmatpush1.bf16.msra.mxu0 0
          %1513 = vmatprep.subr.bf16.mxu0 0
          %1514 = vmatpush1.bf16.msra.mxu0 0
          %1515 = vmatprep.subr.bf16.mxu0 0
          %1516 = vmatpush1.bf16.msra.mxu0 0
          %1517 = vmatprep.mubr.bf16.mxu0 0
          %1518 = vmatmul.mubr.bf16.gmra.mrb[0].mxu0 %v1477
          %v1519 = vpop.f32.mrb[0].mxu0
          %v1520 = vadd.f32 0.0, %v1519
          %v1521 = vpop.f32.mrb[0].mxu0
          %v1522 = vadd.f32 0.0, %v1521
          %v1523 = vpop.f32.mrb[0].mxu0
          %v1524 = vpop.f32.mrb[0].mxu0
          %1525 = vdwg.mxu0
          %v1526 = vadd.f32 %v1458, %v1520
          %v1527 = vadd.f32 %v1459, %v1522
          %v1528 = vsel %vm878, %v1318, 0
          %v1529 = vsel %vm879, %v1319, 0
          %v1532 = vunpack.c.l.b16 %v1528
          %v1533 = vunpack.c.h.b16 %v1528
          %v1534 = vunpack.c.l.b16 %v1529
          %v1535 = vpack.c.b16 %v1532, %v1532
          %v1536 = vpack.c.b16 %v1533, %v1533
          %v1537 = vpack.c.b16 %v1534, %v1534
          %1538 = vrot.lane.b32.xlu0 %v1535, 111
          %v1539 = vpop.permute.xlu0 %1538
          %1540 = vrot.lane.b32.xlu0 %v1536, 111
          %v1541 = vpop.permute.xlu0 %1540
          %1542 = vrot.lane.b32.xlu0 %v1537, 111
          %v1543 = vpop.permute.xlu0 %1542
          %v1544 = vsel %vm293, %v1539, %v1541
          %v1545 = vsel %vm293, %v1541, %v1543
          %v1547 = vsel %vm316, %v983, 0
          %v1550 = vsel %vm320, %v1544, 0
          %v1553 = vsel %vm320, %v1545, 0
          %1555 = vmatprep.subr.bf16.mxu0 %v1553
          %1556 = vmatpush1.bf16.msra.mxu0 %v1550
          %1557 = vmatprep.subr.bf16.mxu0 0
          %1558 = vmatpush1.bf16.msra.mxu0 0
          %1559 = vmatprep.subr.bf16.mxu0 0
          %1560 = vmatpush1.bf16.msra.mxu0 0
          %1561 = vmatprep.subr.bf16.mxu0 0
          %1562 = vmatpush1.bf16.msra.mxu0 0
          %1563 = vmatprep.subr.bf16.mxu0 0
          %1564 = vmatpush1.bf16.msra.mxu0 0
          %1565 = vmatprep.subr.bf16.mxu0 0
          %1566 = vmatpush1.bf16.msra.mxu0 0
          %1567 = vmatprep.subr.bf16.mxu0 0
          %1568 = vmatpush1.bf16.msra.mxu0 0
          %1569 = vmatprep.subr.bf16.mxu0 0
          %1570 = vmatpush1.bf16.msra.mxu0 0
          %1571 = vmatprep.subr.bf16.mxu0 0
          %1572 = vmatpush1.bf16.msra.mxu0 0
          %1573 = vmatprep.subr.bf16.mxu0 0
          %1574 = vmatpush1.bf16.msra.mxu0 0
          %1575 = vmatprep.subr.bf16.mxu0 0
          %1576 = vmatpush1.bf16.msra.mxu0 0
          %1577 = vmatprep.subr.bf16.mxu0 0
          %1578 = vmatpush1.bf16.msra.mxu0 0
          %1579 = vmatprep.subr.bf16.mxu0 0
          %1580 = vmatpush1.bf16.msra.mxu0 0
          %1581 = vmatprep.subr.bf16.mxu0 0
          %1582 = vmatpush1.bf16.msra.mxu0 0
          %1583 = vmatprep.subr.bf16.mxu0 0
          %1584 = vmatpush1.bf16.msra.mxu0 0
          %1585 = vmatprep.subr.bf16.mxu0 0
          %1586 = vmatpush1.bf16.msra.mxu0 0
          %1587 = vmatprep.mubr.bf16.mxu0 0
          %1588 = vmatmul.mubr.bf16.gmra.mrb[0].mxu0 %v1547
          %v1589 = vpop.f32.mrb[0].mxu0
          %v1590 = vadd.f32 0.0, %v1589
          %v1591 = vpop.f32.mrb[0].mxu0
          %v1592 = vadd.f32 0.0, %v1591
          %v1593 = vpop.f32.mrb[0].mxu0
          %v1594 = vpop.f32.mrb[0].mxu0
          %1595 = vdwg.mxu0
          %v1596 = vadd.f32 %v1526, %v1590
          %v1597 = vadd.f32 %v1527, %v1592
          %s1598 = smul.u32 %s971, 8
          %s1599 = scalar_lea.vmem [#allocation9], %s1598
          %v1600 = vld [vmem:[%s1599] sm:$0xff]
          %1602 = vset.pattern.permute.xlu0 0
          %1603 = vperm.xlu0 %1602, %v1600
          %v1604 = vpop.permute.xlu0 %1603
          %v1606 = vadd.f32 %v1596, %v1604
          %v1607 = vadd.f32 %v1597, %v1604
          %v1608 = vld [vmem:[#allocation3] sm:$0xff]
          %v1609 = vld [vmem:[#allocation3 + $0x8] sm:$0xff]
          %v1610 = vadd.f32 %v1606, %v1608
          %v1611 = vadd.f32 %v1607, %v1609
          %1612 = vst [vmem:[#allocation3] sm:$0xff] %v1610
          %1613 = vst [vmem:[#allocation3 + $0x8] sm:$0xff] %v1611
          %v1614 = vpack.c.bf16 %v1610, %v1610
          %v1615 = vpack.c.bf16 %v1611, %v1611
          %v1618 = vunpack.c.l.b16 %v1614
          %v1619 = vunpack.c.l.b16 %v1615
          %v1620 = vpack.c.b16 %v1619, %v1618
          %1622 = vst [vmem:[#allocation2 + $0x4] sm:$0xff] %v1620
        $region49: #{residual_group_forward.1} parent=31 // loop_footer
          %s272 = sadd.s32 1, %s268
        $region50: #{residual_group_forward.1} parent=31 // loop_footer_branch
          %267 = sbr.rel target = $region46
        $region51: #{residual_group_forward.1} parent=31 // loop_exit
          _
        %s1623 = scalar_lea.vmem [#allocation7], 288
        %v1624 = vld [vmem:[%s1623] sm:$0xf]
        %v1625 = vld [vmem:[%s1623 + $0x4] sm:$0xf]
        %v1626 = vld [vmem:[%s1623 + $0x8] sm:$0xf]
        %v1627 = vld [vmem:[%s1623 + $0xc] sm:$0xf]
        %v1628 = vld [vmem:[%s1623 + $0x10] sm:$0xf]
        %v1629 = vld [vmem:[%s1623 + $0x14] sm:$0xf]
        %v1630 = vld [vmem:[%s1623 + $0x18] sm:$0xf]
        %v1631 = vld [vmem:[%s1623 + $0x1c] sm:$0xf]
        %v1632 = vld [vmem:[%s1623 + $0x20] sm:$0xf]
        %v1633 = vld [vmem:[#allocation2] sm:$0xff]
        %v1634 = vld [vmem:[#allocation2 + $0x8] sm:$0xf]
        %vm1635 = vmpackc.low %vm264, %vm263
        %v1636 = vsel %vm1635, 65537, 0
        %1637 = vrot.lane.b32.xlu0 %v1636, 111
        %v1638 = vpop.permute.xlu0 %1637
        %v1639 = vrot.slane %v1638, 4
        %vm1640 = vcmask 908288
        %v1641 = vsel %vm1640, %v1639, %v1638
        %vm1642 = vcmp.ne.s16.totalorder %v1641, 0
        %vm1643 = vcmp.ne.s16.totalorder %v1639, 0
        %v1644 = vsel %vm1642, %v1633, 0
        %v1645 = vsel %vm1643, %v1634, 0
        %v1648 = vunpack.c.l.b16 %v1633
        %v1649 = vunpack.c.h.b16 %v1633
        %v1650 = vunpack.c.l.b16 %v1634
        %v1651 = vpack.c.b16 %v1648, %v1648
        %v1652 = vpack.c.b16 %v1649, %v1649
        %v1653 = vpack.c.b16 %v1650, %v1650
        %1654 = vrot.lane.b32.xlu0 %v1651, 16
        %v1655 = vpop.permute.xlu0 %1654
        %1656 = vrot.lane.b32.xlu0 %v1652, 16
        %v1657 = vpop.permute.xlu0 %1656
        %1658 = vrot.lane.b32.xlu0 %v1653, 16
        %v1659 = vpop.permute.xlu0 %1658
        %vm1660 = vcmask 130048
        %v1661 = vsel %vm1660, %v1655, %v1657
        %v1662 = vsel %vm1660, %v1657, %v1659
        %vm1663 = vcmask 64512
        %v1665 = vsel %vm1663, %v1625, 0
        %vm1667 = vcmask 1043456
        %v1669 = vsel %vm1667, %v1661, 0
        %v1672 = vsel %vm1667, %v1662, 0
        %1674 = vmatprep.subr.bf16.mxu0 %v1672
        %1675 = vmatpush1.bf16.msra.mxu0 %v1669
        %1676 = vmatprep.subr.bf16.mxu0 0
        %1677 = vmatpush1.bf16.msra.mxu0 0
        %1678 = vmatprep.subr.bf16.mxu0 0
        %1679 = vmatpush1.bf16.msra.mxu0 0
        %1680 = vmatprep.subr.bf16.mxu0 0
        %1681 = vmatpush1.bf16.msra.mxu0 0
        %1682 = vmatprep.subr.bf16.mxu0 0
        %1683 = vmatpush1.bf16.msra.mxu0 0
        %1684 = vmatprep.subr.bf16.mxu0 0
        %1685 = vmatpush1.bf16.msra.mxu0 0
        %1686 = vmatprep.subr.bf16.mxu0 0
        %1687 = vmatpush1.bf16.msra.mxu0 0
        %1688 = vmatprep.subr.bf16.mxu0 0
        %1689 = vmatpush1.bf16.msra.mxu0 0
        %1690 = vmatprep.subr.bf16.mxu0 0
        %1691 = vmatpush1.bf16.msra.mxu0 0
        %1692 = vmatprep.subr.bf16.mxu0 0
        %1693 = vmatpush1.bf16.msra.mxu0 0
        %1694 = vmatprep.subr.bf16.mxu0 0
        %1695 = vmatpush1.bf16.msra.mxu0 0
        %1696 = vmatprep.subr.bf16.mxu0 0
        %1697 = vmatpush1.bf16.msra.mxu0 0
        %1698 = vmatprep.subr.bf16.mxu0 0
        %1699 = vmatpush1.bf16.msra.mxu0 0
        %1700 = vmatprep.subr.bf16.mxu0 0
        %1701 = vmatpush1.bf16.msra.mxu0 0
        %1702 = vmatprep.subr.bf16.mxu0 0
        %1703 = vmatpush1.bf16.msra.mxu0 0
        %1704 = vmatprep.subr.bf16.mxu0 0
        %1705 = vmatpush1.bf16.msra.mxu0 0
        %1706 = vmatprep.mubr.bf16.mxu0 0
        %1707 = vmatmul.mubr.bf16.gmra.mrb[0].mxu0 %v1665
        %v1708 = vpop.f32.mrb[0].mxu0
        %v1709 = vadd.f32 0.0, %v1708
        %v1710 = vpop.f32.mrb[0].mxu0
        %v1711 = vadd.f32 0.0, %v1710
        %v1712 = vpop.f32.mrb[0].mxu0
        %v1713 = vpop.f32.mrb[0].mxu0
        %1714 = vdwg.mxu0
        %v1717 = vunpack.c.l.b16 %v1644
        %v1718 = vunpack.c.h.b16 %v1644
        %v1719 = vunpack.c.l.b16 %v1645
        %v1720 = vpack.c.b16 %v1717, %v1717
        %v1721 = vpack.c.b16 %v1718, %v1718
        %v1722 = vpack.c.b16 %v1719, %v1719
        %1723 = vrot.lane.b32.xlu0 %v1720, 17
        %v1724 = vpop.permute.xlu0 %1723
        %1725 = vrot.lane.b32.xlu0 %v1721, 17
        %v1726 = vpop.permute.xlu0 %1725
        %1727 = vrot.lane.b32.xlu0 %v1722, 17
        %v1728 = vpop.permute.xlu0 %1727
        %vm1729 = vcmask 138240
        %v1730 = vsel %vm1729, %v1724, %v1726
        %v1731 = vsel %vm1729, %v1726, %v1728
        %v1733 = vsel %vm1663, %v1624, 0
        %v1736 = vsel %vm1667, %v1730, 0
        %v1739 = vsel %vm1667, %v1731, 0
        %1741 = vmatprep.subr.bf16.mxu0 %v1739
        %1742 = vmatpush1.bf16.msra.mxu0 %v1736
        %1743 = vmatprep.subr.bf16.mxu0 0
        %1744 = vmatpush1.bf16.msra.mxu0 0
        %1745 = vmatprep.subr.bf16.mxu0 0
        %1746 = vmatpush1.bf16.msra.mxu0 0
        %1747 = vmatprep.subr.bf16.mxu0 0
        %1748 = vmatpush1.bf16.msra.mxu0 0
        %1749 = vmatprep.subr.bf16.mxu0 0
        %1750 = vmatpush1.bf16.msra.mxu0 0
        %1751 = vmatprep.subr.bf16.mxu0 0
        %1752 = vmatpush1.bf16.msra.mxu0 0
        %1753 = vmatprep.subr.bf16.mxu0 0
        %1754 = vmatpush1.bf16.msra.mxu0 0
        %1755 = vmatprep.subr.bf16.mxu0 0
        %1756 = vmatpush1.bf16.msra.mxu0 0
        %1757 = vmatprep.subr.bf16.mxu0 0
        %1758 = vmatpush1.bf16.msra.mxu0 0
        %1759 = vmatprep.subr.bf16.mxu0 0
        %1760 = vmatpush1.bf16.msra.mxu0 0
        %1761 = vmatprep.subr.bf16.mxu0 0
        %1762 = vmatpush1.bf16.msra.mxu0 0
        %1763 = vmatprep.subr.bf16.mxu0 0
        %1764 = vmatpush1.bf16.msra.mxu0 0
        %1765 = vmatprep.subr.bf16.mxu0 0
        %1766 = vmatpush1.bf16.msra.mxu0 0
        %1767 = vmatprep.subr.bf16.mxu0 0
        %1768 = vmatpush1.bf16.msra.mxu0 0
        %1769 = vmatprep.subr.bf16.mxu0 0
        %1770 = vmatpush1.bf16.msra.mxu0 0
        %1771 = vmatprep.subr.bf16.mxu0 0
        %1772 = vmatpush1.bf16.msra.mxu0 0
        %1773 = vmatprep.mubr.bf16.mxu0 0
        %1774 = vmatmul.mubr.bf16.gmra.mrb[0].mxu0 %v1733
        %v1775 = vpop.f32.mrb[0].mxu0
        %v1776 = vadd.f32 %v1709, %v1775
        %v1777 = vpop.f32.mrb[0].mxu0
        %v1778 = vadd.f32 %v1711, %v1777
        %v1779 = vpop.f32.mrb[0].mxu0
        %v1780 = vpop.f32.mrb[0].mxu0
        %1781 = vdwg.mxu0
        %vm1782 = vmpackc.low %vm266, %vm265
        %v1783 = vsel %vm1782, 65537, 0
        %1784 = vrot.lane.b32.xlu0 %v1783, 113
        %v1785 = vpop.permute.xlu0 %1784
        %v1786 = vrot.slane %v1785, 4
        %vm1787 = vcmask 924672
        %v1788 = vsel %vm1787, %v1786, %v1785
        %vm1789 = vcmp.ne.s16.totalorder %v1788, 0
        %vm1790 = vcmp.ne.s16.totalorder %v1786, 0
        %v1791 = vsel %vm1789, %v1633, 0
        %v1792 = vsel %vm1790, %v1634, 0
        %v1795 = vunpack.c.l.b16 %v1791
        %v1796 = vunpack.c.h.b16 %v1791
        %v1797 = vunpack.c.l.b16 %v1792
        %v1798 = vpack.c.b16 %v1795, %v1795
        %v1799 = vpack.c.b16 %v1796, %v1796
        %v1800 = vpack.c.b16 %v1797, %v1797
        %1801 = vrot.lane.b32.xlu0 %v1798, 15
        %v1802 = vpop.permute.xlu0 %1801
        %1803 = vrot.lane.b32.xlu0 %v1799, 15
        %v1804 = vpop.permute.xlu0 %1803
        %1805 = vrot.lane.b32.xlu0 %v1800, 15
        %v1806 = vpop.permute.xlu0 %1805
        %vm1807 = vcmask 121856
        %v1808 = vsel %vm1807, %v1802, %v1804
        %v1809 = vsel %vm1807, %v1804, %v1806
        %v1811 = vsel %vm1663, %v1626, 0
        %v1814 = vsel %vm1667, %v1808, 0
        %v1817 = vsel %vm1667, %v1809, 0
        %1819 = vmatprep.subr.bf16.mxu0 %v1817
        %1820 = vmatpush1.bf16.msra.mxu0 %v1814
        %1821 = vmatprep.subr.bf16.mxu0 0
        %1822 = vmatpush1.bf16.msra.mxu0 0
        %1823 = vmatprep.subr.bf16.mxu0 0
        %1824 = vmatpush1.bf16.msra.mxu0 0
        %1825 = vmatprep.subr.bf16.mxu0 0
        %1826 = vmatpush1.bf16.msra.mxu0 0
        %1827 = vmatprep.subr.bf16.mxu0 0
        %1828 = vmatpush1.bf16.msra.mxu0 0
        %1829 = vmatprep.subr.bf16.mxu0 0
        %1830 = vmatpush1.bf16.msra.mxu0 0
        %1831 = vmatprep.subr.bf16.mxu0 0
        %1832 = vmatpush1.bf16.msra.mxu0 0
        %1833 = vmatprep.subr.bf16.mxu0 0
        %1834 = vmatpush1.bf16.msra.mxu0 0
        %1835 = vmatprep.subr.bf16.mxu0 0
        %1836 = vmatpush1.bf16.msra.mxu0 0
        %1837 = vmatprep.subr.bf16.mxu0 0
        %1838 = vmatpush1.bf16.msra.mxu0 0
        %1839 = vmatprep.subr.bf16.mxu0 0
        %1840 = vmatpush1.bf16.msra.mxu0 0
        %1841 = vmatprep.subr.bf16.mxu0 0
        %1842 = vmatpush1.bf16.msra.mxu0 0
        %1843 = vmatprep.subr.bf16.mxu0 0
        %1844 = vmatpush1.bf16.msra.mxu0 0
        %1845 = vmatprep.subr.bf16.mxu0 0
        %1846 = vmatpush1.bf16.msra.mxu0 0
        %1847 = vmatprep.subr.bf16.mxu0 0
        %1848 = vmatpush1.bf16.msra.mxu0 0
        %1849 = vmatprep.subr.bf16.mxu0 0
        %1850 = vmatpush1.bf16.msra.mxu0 0
        %1851 = vmatprep.mubr.bf16.mxu0 0
        %1852 = vmatmul.mubr.bf16.gmra.mrb[0].mxu0 %v1811
        %v1853 = vpop.f32.mrb[0].mxu0
        %v1854 = vadd.f32 0.0, %v1853
        %v1855 = vpop.f32.mrb[0].mxu0
        %v1856 = vadd.f32 0.0, %v1855
        %v1857 = vpop.f32.mrb[0].mxu0
        %v1858 = vpop.f32.mrb[0].mxu0
        %1859 = vdwg.mxu0
        %v1860 = vadd.f32 %v1776, %v1854
        %v1861 = vadd.f32 %v1778, %v1856
        %1862 = vrot.lane.b32.xlu0 %v1636, 127
        %v1863 = vpop.permute.xlu0 %1862
        %v1864 = vrot.slane %v1863, 4
        %vm1865 = vcmask 1039360
        %v1866 = vsel %vm1865, %v1864, %v1863
        %vm1867 = vcmp.ne.s16.totalorder %v1866, 0
        %vm1868 = vcmp.ne.s16.totalorder %v1864, 0
        %v1869 = vsel %vm1867, %v1633, 0
        %v1870 = vsel %vm1868, %v1634, 0
        %v1873 = vunpack.c.l.b16 %v1869
        %v1874 = vunpack.c.h.b16 %v1869
        %v1875 = vunpack.c.l.b16 %v1870
        %v1876 = vpack.c.b16 %v1873, %v1873
        %v1877 = vpack.c.b16 %v1874, %v1874
        %v1878 = vpack.c.b16 %v1875, %v1875
        %1879 = vrot.lane.b32.xlu0 %v1876, 1
        %v1880 = vpop.permute.xlu0 %1879
        %1881 = vrot.lane.b32.xlu0 %v1877, 1
        %v1882 = vpop.permute.xlu0 %1881
        %1883 = vrot.lane.b32.xlu0 %v1878, 1
        %v1884 = vpop.permute.xlu0 %1883
        %vm1885 = vcmask 7168
        %v1886 = vsel %vm1885, %v1880, %v1882
        %v1887 = vsel %vm1885, %v1882, %v1884
        %v1889 = vsel %vm1663, %v1627, 0
        %v1892 = vsel %vm1667, %v1886, 0
        %v1895 = vsel %vm1667, %v1887, 0
        %1897 = vmatprep.subr.bf16.mxu0 %v1895
        %1898 = vmatpush1.bf16.msra.mxu0 %v1892
        %1899 = vmatprep.subr.bf16.mxu0 0
        %1900 = vmatpush1.bf16.msra.mxu0 0
        %1901 = vmatprep.subr.bf16.mxu0 0
        %1902 = vmatpush1.bf16.msra.mxu0 0
        %1903 = vmatprep.subr.bf16.mxu0 0
        %1904 = vmatpush1.bf16.msra.mxu0 0
        %1905 = vmatprep.subr.bf16.mxu0 0
        %1906 = vmatpush1.bf16.msra.mxu0 0
        %1907 = vmatprep.subr.bf16.mxu0 0
        %1908 = vmatpush1.bf16.msra.mxu0 0
        %1909 = vmatprep.subr.bf16.mxu0 0
        %1910 = vmatpush1.bf16.msra.mxu0 0
        %1911 = vmatprep.subr.bf16.mxu0 0
        %1912 = vmatpush1.bf16.msra.mxu0 0
        %1913 = vmatprep.subr.bf16.mxu0 0
        %1914 = vmatpush1.bf16.msra.mxu0 0
        %1915 = vmatprep.subr.bf16.mxu0 0
        %1916 = vmatpush1.bf16.msra.mxu0 0
        %1917 = vmatprep.subr.bf16.mxu0 0
        %1918 = vmatpush1.bf16.msra.mxu0 0
        %1919 = vmatprep.subr.bf16.mxu0 0
        %1920 = vmatpush1.bf16.msra.mxu0 0
        %1921 = vmatprep.subr.bf16.mxu0 0
        %1922 = vmatpush1.bf16.msra.mxu0 0
        %1923 = vmatprep.subr.bf16.mxu0 0
        %1924 = vmatpush1.bf16.msra.mxu0 0
        %1925 = vmatprep.subr.bf16.mxu0 0
        %1926 = vmatpush1.bf16.msra.mxu0 0
        %1927 = vmatprep.subr.bf16.mxu0 0
        %1928 = vmatpush1.bf16.msra.mxu0 0
        %1929 = vmatprep.mubr.bf16.mxu0 0
        %1930 = vmatmul.mubr.bf16.gmra.mrb[0].mxu0 %v1889
        %v1931 = vpop.f32.mrb[0].mxu0
        %v1932 = vadd.f32 0.0, %v1931
        %v1933 = vpop.f32.mrb[0].mxu0
        %v1934 = vadd.f32 0.0, %v1933
        %v1935 = vpop.f32.mrb[0].mxu0
        %v1936 = vpop.f32.mrb[0].mxu0
        %1937 = vdwg.mxu0
        %v1938 = vadd.f32 %v1860, %v1932
        %v1939 = vadd.f32 %v1861, %v1934
        %v1940 = vld [vmem:[#allocation2 + $0x4] sm:$0xff]
        %v1942 = vunpack.c.l.b16 %v1940
        %v1943 = vunpack.c.h.b16 %v1940
        %v1944 = vpack.c.b16 %v1942, %v1942
        %v1945 = vpack.c.b16 %v1943, %v1943
        %v1947 = vsel %vm1663, %v1628, 0
        %v1950 = vsel %vm1667, %v1944, 0
        %v1953 = vsel %vm1667, %v1945, 0
        %1955 = vmatprep.subr.bf16.mxu0 %v1953
        %1956 = vmatpush1.bf16.msra.mxu0 %v1950
        %1957 = vmatprep.subr.bf16.mxu0 0
        %1958 = vmatpush1.bf16.msra.mxu0 0
        %1959 = vmatprep.subr.bf16.mxu0 0
        %1960 = vmatpush1.bf16.msra.mxu0 0
        %1961 = vmatprep.subr.bf16.mxu0 0
        %1962 = vmatpush1.bf16.msra.mxu0 0
        %1963 = vmatprep.subr.bf16.mxu0 0
        %1964 = vmatpush1.bf16.msra.mxu0 0
        %1965 = vmatprep.subr.bf16.mxu0 0
        %1966 = vmatpush1.bf16.msra.mxu0 0
        %1967 = vmatprep.subr.bf16.mxu0 0
        %1968 = vmatpush1.bf16.msra.mxu0 0
        %1969 = vmatprep.subr.bf16.mxu0 0
        %1970 = vmatpush1.bf16.msra.mxu0 0
        %1971 = vmatprep.subr.bf16.mxu0 0
        %1972 = vmatpush1.bf16.msra.mxu0 0
        %1973 = vmatprep.subr.bf16.mxu0 0
        %1974 = vmatpush1.bf16.msra.mxu0 0
        %1975 = vmatprep.subr.bf16.mxu0 0
        %1976 = vmatpush1.bf16.msra.mxu0 0
        %1977 = vmatprep.subr.bf16.mxu0 0
        %1978 = vmatpush1.bf16.msra.mxu0 0
        %1979 = vmatprep.subr.bf16.mxu0 0
        %1980 = vmatpush1.bf16.msra.mxu0 0
        %1981 = vmatprep.subr.bf16.mxu0 0
        %1982 = vmatpush1.bf16.msra.mxu0 0
        %1983 = vmatprep.subr.bf16.mxu0 0
        %1984 = vmatpush1.bf16.msra.mxu0 0
        %1985 = vmatprep.subr.bf16.mxu0 0
        %1986 = vmatpush1.bf16.msra.mxu0 0
        %1987 = vmatprep.mubr.bf16.mxu0 0
        %1988 = vmatmul.mubr.bf16.gmra.mrb[0].mxu0 %v1947
        %v1989 = vpop.f32.mrb[0].mxu0
        %v1990 = vadd.f32 0.0, %v1989
        %v1991 = vpop.f32.mrb[0].mxu0
        %v1992 = vadd.f32 0.0, %v1991
        %v1993 = vpop.f32.mrb[0].mxu0
        %v1994 = vpop.f32.mrb[0].mxu0
        %1995 = vdwg.mxu0
        %v1996 = vadd.f32 %v1938, %v1990
        %v1997 = vadd.f32 %v1939, %v1992
        %v1998 = vld [vmem:[#allocation2 + $0x4] sm:$0xff]
        %v1999 = vld [vmem:[#allocation2 + $0xc] sm:$0xf]
        %2000 = vrot.lane.b32.xlu0 %v1783, 1
        %v2001 = vpop.permute.xlu0 %2000
        %v2002 = vrot.slane %v2001, 4
        %v2003 = vsel %vm1885, %v2002, %v2001
        %vm2004 = vcmp.ne.s16.totalorder %v2003, 0
        %vm2005 = vcmp.ne.s16.totalorder %v2002, 0
        %v2006 = vsel %vm2004, %v1998, 0
        %v2007 = vsel %vm2005, %v1999, 0
        %v2010 = vunpack.c.l.b16 %v2006
        %v2011 = vunpack.c.h.b16 %v2006
        %v2012 = vunpack.c.l.b16 %v2007
        %v2013 = vpack.c.b16 %v2010, %v2010
        %v2014 = vpack.c.b16 %v2011, %v2011
        %v2015 = vpack.c.b16 %v2012, %v2012
        %2016 = vrot.lane.b32.xlu0 %v2013, 127
        %v2017 = vpop.permute.xlu0 %2016
        %2018 = vrot.lane.b32.xlu0 %v2014, 127
        %v2019 = vpop.permute.xlu0 %2018
        %2020 = vrot.lane.b32.xlu0 %v2015, 127
        %v2021 = vpop.permute.xlu0 %2020
        %v2022 = vsel %vm1865, %v2017, %v2019
        %v2023 = vsel %vm1865, %v2019, %v2021
        %v2025 = vsel %vm1663, %v1629, 0
        %v2028 = vsel %vm1667, %v2022, 0
        %v2031 = vsel %vm1667, %v2023, 0
        %2033 = vmatprep.subr.bf16.mxu0 %v2031
        %2034 = vmatpush1.bf16.msra.mxu0 %v2028
        %2035 = vmatprep.subr.bf16.mxu0 0
        %2036 = vmatpush1.bf16.msra.mxu0 0
        %2037 = vmatprep.subr.bf16.mxu0 0
        %2038 = vmatpush1.bf16.msra.mxu0 0
        %2039 = vmatprep.subr.bf16.mxu0 0
        %2040 = vmatpush1.bf16.msra.mxu0 0
        %2041 = vmatprep.subr.bf16.mxu0 0
        %2042 = vmatpush1.bf16.msra.mxu0 0
        %2043 = vmatprep.subr.bf16.mxu0 0
        %2044 = vmatpush1.bf16.msra.mxu0 0
        %2045 = vmatprep.subr.bf16.mxu0 0
        %2046 = vmatpush1.bf16.msra.mxu0 0
        %2047 = vmatprep.subr.bf16.mxu0 0
        %2048 = vmatpush1.bf16.msra.mxu0 0
        %2049 = vmatprep.subr.bf16.mxu0 0
        %2050 = vmatpush1.bf16.msra.mxu0 0
        %2051 = vmatprep.subr.bf16.mxu0 0
        %2052 = vmatpush1.bf16.msra.mxu0 0
        %2053 = vmatprep.subr.bf16.mxu0 0
        %2054 = vmatpush1.bf16.msra.mxu0 0
        %2055 = vmatprep.subr.bf16.mxu0 0
        %2056 = vmatpush1.bf16.msra.mxu0 0
        %2057 = vmatprep.subr.bf16.mxu0 0
        %2058 = vmatpush1.bf16.msra.mxu0 0
        %2059 = vmatprep.subr.bf16.mxu0 0
        %2060 = vmatpush1.bf16.msra.mxu0 0
        %2061 = vmatprep.subr.bf16.mxu0 0
        %2062 = vmatpush1.bf16.msra.mxu0 0
        %2063 = vmatprep.subr.bf16.mxu0 0
        %2064 = vmatpush1.bf16.msra.mxu0 0
        %2065 = vmatprep.mubr.bf16.mxu0 0
        %2066 = vmatmul.mubr.bf16.gmra.mrb[0].mxu0 %v2025
        %v2067 = vpop.f32.mrb[0].mxu0
        %v2068 = vadd.f32 0.0, %v2067
        %v2069 = vpop.f32.mrb[0].mxu0
        %v2070 = vadd.f32 0.0, %v2069
        %v2071 = vpop.f32.mrb[0].mxu0
        %v2072 = vpop.f32.mrb[0].mxu0
        %2073 = vdwg.mxu0
        %v2074 = vadd.f32 %v1996, %v2068
        %v2075 = vadd.f32 %v1997, %v2070
        %2076 = vrot.lane.b32.xlu0 %v1636, 15
        %v2077 = vpop.permute.xlu0 %2076
        %v2078 = vrot.slane %v2077, 4
        %v2079 = vsel %vm1807, %v2078, %v2077
        %vm2080 = vcmp.ne.s16.totalorder %v2079, 0
        %vm2081 = vcmp.ne.s16.totalorder %v2078, 0
        %v2082 = vsel %vm2080, %v1998, 0
        %v2083 = vsel %vm2081, %v1999, 0
        %v2086 = vunpack.c.l.b16 %v2082
        %v2087 = vunpack.c.h.b16 %v2082
        %v2088 = vunpack.c.l.b16 %v2083
        %v2089 = vpack.c.b16 %v2086, %v2086
        %v2090 = vpack.c.b16 %v2087, %v2087
        %v2091 = vpack.c.b16 %v2088, %v2088
        %2092 = vrot.lane.b32.xlu0 %v2089, 113
        %v2093 = vpop.permute.xlu0 %2092
        %2094 = vrot.lane.b32.xlu0 %v2090, 113
        %v2095 = vpop.permute.xlu0 %2094
        %2096 = vrot.lane.b32.xlu0 %v2091, 113
        %v2097 = vpop.permute.xlu0 %2096
        %v2098 = vsel %vm1787, %v2093, %v2095
        %v2099 = vsel %vm1787, %v2095, %v2097
        %v2101 = vsel %vm1663, %v1630, 0
        %v2104 = vsel %vm1667, %v2098, 0
        %v2107 = vsel %vm1667, %v2099, 0
        %2109 = vmatprep.subr.bf16.mxu0 %v2107
        %2110 = vmatpush1.bf16.msra.mxu0 %v2104
        %2111 = vmatprep.subr.bf16.mxu0 0
        %2112 = vmatpush1.bf16.msra.mxu0 0
        %2113 = vmatprep.subr.bf16.mxu0 0
        %2114 = vmatpush1.bf16.msra.mxu0 0
        %2115 = vmatprep.subr.bf16.mxu0 0
        %2116 = vmatpush1.bf16.msra.mxu0 0
        %2117 = vmatprep.subr.bf16.mxu0 0
        %2118 = vmatpush1.bf16.msra.mxu0 0
        %2119 = vmatprep.subr.bf16.mxu0 0
        %2120 = vmatpush1.bf16.msra.mxu0 0
        %2121 = vmatprep.subr.bf16.mxu0 0
        %2122 = vmatpush1.bf16.msra.mxu0 0
        %2123 = vmatprep.subr.bf16.mxu0 0
        %2124 = vmatpush1.bf16.msra.mxu0 0
        %2125 = vmatprep.subr.bf16.mxu0 0
        %2126 = vmatpush1.bf16.msra.mxu0 0
        %2127 = vmatprep.subr.bf16.mxu0 0
        %2128 = vmatpush1.bf16.msra.mxu0 0
        %2129 = vmatprep.subr.bf16.mxu0 0
        %2130 = vmatpush1.bf16.msra.mxu0 0
        %2131 = vmatprep.subr.bf16.mxu0 0
        %2132 = vmatpush1.bf16.msra.mxu0 0
        %2133 = vmatprep.subr.bf16.mxu0 0
        %2134 = vmatpush1.bf16.msra.mxu0 0
        %2135 = vmatprep.subr.bf16.mxu0 0
        %2136 = vmatpush1.bf16.msra.mxu0 0
        %2137 = vmatprep.subr.bf16.mxu0 0
        %2138 = vmatpush1.bf16.msra.mxu0 0
        %2139 = vmatprep.subr.bf16.mxu0 0
        %2140 = vmatpush1.bf16.msra.mxu0 0
        %2141 = vmatprep.mubr.bf16.mxu0 0
        %2142 = vmatmul.mubr.bf16.gmra.mrb[0].mxu0 %v2101
        %v2143 = vpop.f32.mrb[0].mxu0
        %v2144 = vadd.f32 0.0, %v2143
        %v2145 = vpop.f32.mrb[0].mxu0
        %v2146 = vadd.f32 0.0, %v2145
        %v2147 = vpop.f32.mrb[0].mxu0
        %v2148 = vpop.f32.mrb[0].mxu0
        %2149 = vdwg.mxu0
        %v2150 = vadd.f32 %v2074, %v2144
        %v2151 = vadd.f32 %v2075, %v2146
        %v2154 = vunpack.c.l.b16 %v1998
        %v2155 = vunpack.c.h.b16 %v1998
        %v2156 = vunpack.c.l.b16 %v1999
        %v2157 = vpack.c.b16 %v2154, %v2154
        %v2158 = vpack.c.b16 %v2155, %v2155
        %v2159 = vpack.c.b16 %v2156, %v2156
        %2160 = vrot.lane.b32.xlu0 %v2157, 112
        %v2161 = vpop.permute.xlu0 %2160
        %2162 = vrot.lane.b32.xlu0 %v2158, 112
        %v2163 = vpop.permute.xlu0 %2162
        %2164 = vrot.lane.b32.xlu0 %v2159, 112
        %v2165 = vpop.permute.xlu0 %2164
        %vm2166 = vcmask 916480
        %v2167 = vsel %vm2166, %v2161, %v2163
        %v2168 = vsel %vm2166, %v2163, %v2165
        %v2170 = vsel %vm1663, %v1631, 0
        %v2173 = vsel %vm1667, %v2167, 0
        %v2176 = vsel %vm1667, %v2168, 0
        %2178 = vmatprep.subr.bf16.mxu0 %v2176
        %2179 = vmatpush1.bf16.msra.mxu0 %v2173
        %2180 = vmatprep.subr.bf16.mxu0 0
        %2181 = vmatpush1.bf16.msra.mxu0 0
        %2182 = vmatprep.subr.bf16.mxu0 0
        %2183 = vmatpush1.bf16.msra.mxu0 0
        %2184 = vmatprep.subr.bf16.mxu0 0
        %2185 = vmatpush1.bf16.msra.mxu0 0
        %2186 = vmatprep.subr.bf16.mxu0 0
        %2187 = vmatpush1.bf16.msra.mxu0 0
        %2188 = vmatprep.subr.bf16.mxu0 0
        %2189 = vmatpush1.bf16.msra.mxu0 0
        %2190 = vmatprep.subr.bf16.mxu0 0
        %2191 = vmatpush1.bf16.msra.mxu0 0
        %2192 = vmatprep.subr.bf16.mxu0 0
        %2193 = vmatpush1.bf16.msra.mxu0 0
        %2194 = vmatprep.subr.bf16.mxu0 0
        %2195 = vmatpush1.bf16.msra.mxu0 0
        %2196 = vmatprep.subr.bf16.mxu0 0
        %2197 = vmatpush1.bf16.msra.mxu0 0
        %2198 = vmatprep.subr.bf16.mxu0 0
        %2199 = vmatpush1.bf16.msra.mxu0 0
        %2200 = vmatprep.subr.bf16.mxu0 0
        %2201 = vmatpush1.bf16.msra.mxu0 0
        %2202 = vmatprep.subr.bf16.mxu0 0
        %2203 = vmatpush1.bf16.msra.mxu0 0
        %2204 = vmatprep.subr.bf16.mxu0 0
        %2205 = vmatpush1.bf16.msra.mxu0 0
        %2206 = vmatprep.subr.bf16.mxu0 0
        %2207 = vmatpush1.bf16.msra.mxu0 0
        %2208 = vmatprep.subr.bf16.mxu0 0
        %2209 = vmatpush1.bf16.msra.mxu0 0
        %2210 = vmatprep.mubr.bf16.mxu0 0
        %2211 = vmatmul.mubr.bf16.gmra.mrb[0].mxu0 %v2170
        %v2212 = vpop.f32.mrb[0].mxu0
        %v2213 = vadd.f32 0.0, %v2212
        %v2214 = vpop.f32.mrb[0].mxu0
        %v2215 = vadd.f32 0.0, %v2214
        %v2216 = vpop.f32.mrb[0].mxu0
        %v2217 = vpop.f32.mrb[0].mxu0
        %2218 = vdwg.mxu0
        %v2219 = vadd.f32 %v2150, %v2213
        %v2220 = vadd.f32 %v2151, %v2215
        %2221 = vrot.lane.b32.xlu0 %v1783, 17
        %v2222 = vpop.permute.xlu0 %2221
        %v2223 = vrot.slane %v2222, 4
        %v2224 = vsel %vm1729, %v2223, %v2222
        %vm2225 = vcmp.ne.s16.totalorder %v2224, 0
        %vm2226 = vcmp.ne.s16.totalorder %v2223, 0
        %v2227 = vsel %vm2225, %v1998, 0
        %v2228 = vsel %vm2226, %v1999, 0
        %v2231 = vunpack.c.l.b16 %v2227
        %v2232 = vunpack.c.h.b16 %v2227
        %v2233 = vunpack.c.l.b16 %v2228
        %v2234 = vpack.c.b16 %v2231, %v2231
        %v2235 = vpack.c.b16 %v2232, %v2232
        %v2236 = vpack.c.b16 %v2233, %v2233
        %2237 = vrot.lane.b32.xlu0 %v2234, 111
        %v2238 = vpop.permute.xlu0 %2237
        %2239 = vrot.lane.b32.xlu0 %v2235, 111
        %v2240 = vpop.permute.xlu0 %2239
        %2241 = vrot.lane.b32.xlu0 %v2236, 111
        %v2242 = vpop.permute.xlu0 %2241
        %v2243 = vsel %vm1640, %v2238, %v2240
        %v2244 = vsel %vm1640, %v2240, %v2242
        %v2246 = vsel %vm1663, %v1632, 0
        %v2249 = vsel %vm1667, %v2243, 0
        %v2252 = vsel %vm1667, %v2244, 0
        %2254 = vmatprep.subr.bf16.mxu0 %v2252
        %2255 = vmatpush1.bf16.msra.mxu0 %v2249
        %2256 = vmatprep.subr.bf16.mxu0 0
        %2257 = vmatpush1.bf16.msra.mxu0 0
        %2258 = vmatprep.subr.bf16.mxu0 0
        %2259 = vmatpush1.bf16.msra.mxu0 0
        %2260 = vmatprep.subr.bf16.mxu0 0
        %2261 = vmatpush1.bf16.msra.mxu0 0
        %2262 = vmatprep.subr.bf16.mxu0 0
        %2263 = vmatpush1.bf16.msra.mxu0 0
        %2264 = vmatprep.subr.bf16.mxu0 0
        %2265 = vmatpush1.bf16.msra.mxu0 0
        %2266 = vmatprep.subr.bf16.mxu0 0
        %2267 = vmatpush1.bf16.msra.mxu0 0
        %2268 = vmatprep.subr.bf16.mxu0 0
        %2269 = vmatpush1.bf16.msra.mxu0 0
        %2270 = vmatprep.subr.bf16.mxu0 0
        %2271 = vmatpush1.bf16.msra.mxu0 0
        %2272 = vmatprep.subr.bf16.mxu0 0
        %2273 = vmatpush1.bf16.msra.mxu0 0
        %2274 = vmatprep.subr.bf16.mxu0 0
        %2275 = vmatpush1.bf16.msra.mxu0 0
        %2276 = vmatprep.subr.bf16.mxu0 0
        %2277 = vmatpush1.bf16.msra.mxu0 0
        %2278 = vmatprep.subr.bf16.mxu0 0
        %2279 = vmatpush1.bf16.msra.mxu0 0
        %2280 = vmatprep.subr.bf16.mxu0 0
        %2281 = vmatpush1.bf16.msra.mxu0 0
        %2282 = vmatprep.subr.bf16.mxu0 0
        %2283 = vmatpush1.bf16.msra.mxu0 0
        %2284 = vmatprep.subr.bf16.mxu0 0
        %2285 = vmatpush1.bf16.msra.mxu0 0
        %2286 = vmatprep.mubr.bf16.mxu0 0
        %2287 = vmatmul.mubr.bf16.gmra.mrb[0].mxu0 %v2246
        %v2288 = vpop.f32.mrb[0].mxu0
        %v2289 = vadd.f32 0.0, %v2288
        %v2290 = vpop.f32.mrb[0].mxu0
        %v2291 = vadd.f32 0.0, %v2290
        %v2292 = vpop.f32.mrb[0].mxu0
        %v2293 = vpop.f32.mrb[0].mxu0
        %2294 = vdwg.mxu0
        %v2295 = vadd.f32 %v2219, %v2289
        %v2296 = vadd.f32 %v2220, %v2291
        %s2297 = scalar_lea.vmem [#allocation9], 64
        %v2298 = vld [vmem:[%s2297] sm:$0xff]
        %2300 = vset.pattern.permute.xlu0 0
        %2301 = vperm.xlu0 %2300, %v2298
        %v2302 = vpop.permute.xlu0 %2301
        %v2304 = vadd.f32 %v2295, %v2302
        %v2305 = vadd.f32 %v2296, %v2302
        %v2306 = vld [vmem:[%s185] sm:$0xff]
        %v2307 = vld [vmem:[%s185 + $0x8] sm:$0xff]
        %v2308 = vadd.f32 %v2304, %v2306
        %v2309 = vadd.f32 %v2305, %v2307
        %2310 = vst [vmem:[%s215] sm:$0xff] %v2308
        %2311 = vst [vmem:[%s215 + $0x8] sm:$0xff] %v2309
        %s2312 = sand.u32 %s97, 1
        %s2313 = scalar_lea.sflag [#allocation6], %s2312
        %s2314 = sand.u32 %s97, 1
        %s2315 = smul.addr %s2314, 16
        %s2316 = scalar_lea.vmem [#allocation10], %s2315
        // Predicated region
        $region52: #{residual_group_forward.1} parent=31 // pred_check
          %p2317 = pneg %p107
        $region53: #{residual_group_forward.1} parent=31 // pred_check_branch
          %2319 = sbr.rel (%p2317) target = $region55
        $region54: #{residual_group_forward.1} parent=31 // pred_region
          %s2321 = ssub.s32 256, 256
          %2322 = vsyncadd %s2313, %s2321
          %s2323 = smul.addr %s21, 2
          %s2324 = smul.addr %s2323, 128
          %s2325 = scalar_lea.hbm %s3, %s2324
          %s2327 = sshll.u32 %s2316, 4
          %s2328 = int_to_ptr.vmem [resolvable:$true] %s2327
          %2330 = dma.vmem_to_hbm [thread:$0]  %s2328, 256, %s2325, %s2313
        $region55: #{residual_group_forward.1} parent=31 // pred_fallthru
          _
      $region32: #{residual_group_forward.1} parent=5 // pred_fallthru
        _
      %p2331 = scmp.le.s32.totalorder 2, %s16
      // Predicated region
      $region56: #{residual_group_forward.1} parent=5 // pred_check
        %p2332 = pneg %p2331
      $region57: #{residual_group_forward.1} parent=5 // pred_check_branch
        %2334 = sbr.rel (%p2332) target = $region59
      $region58: #{residual_group_forward.1} parent=5 // pred_region
        %s2335 = ssub.s32 %s16, 2
        // Predicated region
        $region60: #{residual_group_forward.1} parent=58 // pred_check
          %p2336 = pneg %p113
        $region61: #{residual_group_forward.1} parent=58 // pred_check_branch
          %2338 = sbr.rel (%p2336) target = $region63
        $region62: #{residual_group_forward.1} parent=58 // pred_region
          %s2339 = sand.u32 %s98, 1
          %s2340 = scalar_lea.sflag [#allocation6], %s2339
          %s2341 = sand.u32 %s98, 1
          %s2342 = smul.addr %s2341, 16
          %s2343 = scalar_lea.vmem [#allocation10], %s2342
          %2344 = dma.done %s2340, 256
        $region63: #{residual_group_forward.1} parent=58 // pred_fallthru
          _
      $region59: #{residual_group_forward.1} parent=5 // pred_fallthru
        _
    $region6: #{residual_group_forward.1} parent=1 // loop_footer
      %s20 = sadd.s32 1, %s16
    $region7: #{residual_group_forward.1} parent=1 // loop_footer_branch
      %15 = sbr.rel target = $region3
    $region8: #{residual_group_forward.1} parent=1 // loop_exit
      _
    %2345 = vsyncpa [#allocation5], 1
    %s2346 = scalar_lea.sflag [#allocation5], 1
    %2347 = vsyncpa %s2346, 1
    %2348 = vsyncpa [#allocation8], 1
    %2349 = vsyncpa [#allocation6], 1
    %s2350 = scalar_lea.sflag [#allocation6], 1
    %2351 = vsyncpa %s2350, 1

</llo_original>
